<compile_context>
chip_gen: v7x
topology: tpu7x:2x2x1
jax: 0.10.0
libtpu: 0.0.40
codegen_flags: <defaults>
</compile_context>

<pallas_src>
import functools

import jax
import jax.numpy as jnp
from jax.experimental import pallas as pl
from jax.experimental.pallas import tpu as pltpu


def _vmem_capacity_bytes():
    try:
        cap = int(pltpu.get_tpu_info().vmem_capacity_bytes)
        if cap > 0:
            return cap
    except Exception:
        pass
    return 64 * 1024 * 1024  # conservative (v7x-sized) fallback


# ----------------------------------------------------------------------------
# Fused kernel.
# Grid = (batch tiles ["parallel"], task-node groups ["arbitrary" reduction]).
#   k == 0    : init accumulator with action part + compute-node part + b_fc'
#   every k   : embed g task nodes (one dot each for node/task data, already in
#               lane-concat layout), broadcast-add, and fold into the fc matmul
#               against this group's K-tile of w_fc (K = T*d_model per node)
#   k == last : score head (Linear -> ReLU -> Linear), write q for this tile
# ----------------------------------------------------------------------------
def _critic_fused_kernel(g, mxu_dtype,
                         tn_ref, td_ref, cn_ref, act_ref,
                         w_tn_rep_ref, w_td_blk_ref, w_cn_blk_ref,
                         w_seq_ref, w_cnf_ref, w_act_ref, b_fc_ref,
                         w1_ref, b1_ref, w2_ref, b2_ref,
                         out_ref, acc_ref):
    k = pl.program_id(1)

    # ---------------- one-time contributions (per batch tile) ----------------
    @pl.when(k == 0)
    def _init():
        acc0 = jnp.dot(act_ref[...].astype(mxu_dtype), w_act_ref[...],
                       preferred_element_type=jnp.float32) + b_fc_ref[...]
        # all m2 compute-node embeddings in one block-diagonal dot, then one
        # K = m2*d_model fc contraction
        cn_emb = jnp.dot(cn_ref[...], w_cn_blk_ref[...],
                         preferred_element_type=jnp.float32)
        acc_ref[...] = acc0 + jnp.dot(cn_emb.astype(mxu_dtype), w_cnf_ref[...],
                                      preferred_element_type=jnp.float32)

    # ---- g task nodes: embeddings + broadcast, fused into the fc matmul -----
    acc = acc_ref[...]
    for i in range(g):  # static, small trip count -> unrolled
        # (bt, d_node) @ (d_node, T*d_model): tn embedding pre-tiled across the
        # T lane groups (torch: tn_emb.unsqueeze(2) broadcast)
        tn_rep = jnp.dot(tn_ref[i], w_tn_rep_ref[...],
                         preferred_element_type=jnp.float32)
        # (bt, T*d_task) @ block-diag (T*d_task, T*d_model): all T task-data
        # embeddings in one dot, already lane-concatenated
        td_all = jnp.dot(td_ref[i], w_td_blk_ref[...],
                         preferred_element_type=jnp.float32)
        combined = (tn_rep + td_all).astype(mxu_dtype)      # (bt, T*d_model)
        # single full-K fc contraction for this node
        acc = acc + jnp.dot(combined, w_seq_ref[i],
                            preferred_element_type=jnp.float32)
    acc_ref[...] = acc

    # ------------------------------ score head -------------------------------
    @pl.when(k == pl.num_programs(1) - 1)
    def _finalize():
        h = jnp.dot(acc_ref[...].astype(mxu_dtype), w1_ref[...],
                    preferred_element_type=jnp.float32) + b1_ref[...]
        h = jnp.maximum(h, 0.0)
        # N=1 output head: VPU multiply + lane reduce (keeps the MXU free)
        out_ref[...] = jnp.sum(h * w2_ref[...], axis=-1, keepdims=True) + b2_ref[...]


# ----------------------------------------------------------------------------
# Wrapper: layout plumbing (cheap transposes/reshapes of small activations,
# free row-slices + tiny kron/tile/bias-fold on weights) + the pallas_call.
# ----------------------------------------------------------------------------
def critic_forward(params, task_node, task_data, compute_node,
                   task_mask, compute_node_mask, action,
                   *, d_node, d_task, max_tasks, m1, m2, d_model,
                   batch_tile=None, mxu_dtype=jnp.bfloat16):
    # task_mask / compute_node_mask are accepted for signature parity with the
    # torch module but are unused by its forward pass.
    del task_mask, compute_node_mask

    B = task_node.shape[0]
    T = max_tasks
    H = 4 * d_model
    n_act = m1 * T * (m2 + 1)
    n_seq = m1 * T * d_model
    n_cn = m2 * d_model

    # Default: single batch tile so the dominant w_seq stream is fetched once.
    bt = B if batch_tile is None else batch_tile
    assert B % bt == 0 and (bt == B or bt % 8 == 0), \
        "batch_tile must divide B and be a multiple of 8 (or equal B)"

    f32 = jnp.float32
    # Activation layouts: task-node index leads (reduction axis walks it);
    # task-data and compute-node features are lane-concatenated so every
    # embedding is one dense 2-D dot.
    tn_t = jnp.transpose(task_node.astype(f32), (1, 0, 2))           # (m1, B, d_node)
    td_lane = jnp.transpose(task_data.astype(f32), (1, 0, 2, 3)
                            ).reshape(m1, B, T * d_task)             # (m1, B, T*d_task)
    cn_flat = compute_node.astype(f32).reshape(B, m2 * d_node)       # (B, m2*d_node)
    act2 = action.astype(f32).reshape(B, n_act)

    (w_tn, b_tn) = params["task_node"]
    (w_td, b_td) = params["task_data"]
    (w_cn, b_cn) = params["compute_node"]
    (w_fc, b_fc) = params["fc"]
    (w1, b1) = params["score1"]
    (w2, b2) = params["score2"]

    # Row-wise decomposition of w_fc: feature vector = [seq | compute | action]
    w_seq3 = w_fc[:n_seq].reshape(m1, T * d_model, H)                # node-tiled
    w_cnf = w_fc[n_seq:n_seq + n_cn]                                 # (m2*d_model, H)
    w_act = w_fc[n_seq + n_cn:]                                      # (n_act, H)

    # Fold every bias-through-fc term into the fc bias (mathematically exact).
    s_seq = w_fc[:n_seq].reshape(m1 * T, d_model, H).sum(axis=0)     # (d_model, H)
    s_cnf = w_cnf.reshape(m2, d_model, H).sum(axis=0)                # (d_model, H)
    b_fc_f = (b_fc + (b_tn + b_td) @ s_seq + b_cn @ s_cnf).astype(f32)

    # Embedding weights laid out so every contraction is one dense 2-D dot:
    #   tile(w_tn, (1,T))     -> tn embedding replicated across T lane groups
    #   kron(eye(T), w_td)    -> all T task embeddings, lane-concatenated
    #   kron(eye(m2), w_cn)   -> all m2 compute-node embeddings, lane-concat
    w_tn_rep = jnp.tile(w_tn.astype(f32), (1, T))                    # (d_node, T*d_model)
    w_td_blk = jnp.kron(jnp.eye(T, dtype=f32), w_td.astype(f32))     # (T*d_task, T*d_model)
    w_cn_blk = jnp.kron(jnp.eye(m2, dtype=f32), w_cn.astype(f32))    # (m2*d_node, m2*d_model)

    # Dominant MXU / HBM streams optionally in bf16; accumulation stays f32.
    w_seq_c = w_seq3.astype(mxu_dtype)
    w_cnf_c = w_cnf.astype(mxu_dtype)
    w_act_c = w_act.astype(mxu_dtype)
    w1_c = w1.astype(mxu_dtype)
    b1_f = b1.astype(f32)
    w2_row = w2.astype(f32).reshape(1, 2 * d_model)
    b2_f = b2.astype(f32)

    # -------- generation-aware tiling: collapse the node axis if it fits -----
    phys_vmem = _vmem_capacity_bytes()
    vmem_limit = min(int(phys_vmem), max(32 * 1024 * 1024, int(phys_vmem * 0.75)))
    wi = jnp.dtype(mxu_dtype).itemsize

    def est_bytes(g):
        streamed = (g * bt * d_node * 4 + g * bt * T * d_task * 4
                    + g * T * d_model * H * wi)
        resident = (bt * (m2 * d_node + n_act) * 4
                    + (d_node + T * d_task) * T * d_model * 4
                    + (m2 * d_node) * (m2 * d_model) * 4
                    + (n_cn + n_act) * H * wi + H * 4
                    + H * 2 * d_model * wi + 4 * 4 * d_model + 4
                    + bt * H * 4 + bt * 4)
        return 2 * (streamed + resident)   # conservative: double-buffer all

    g = 1
    for cand in range(m1, 0, -1):
        if m1 % cand == 0 and est_bytes(cand) <= vmem_limit:
            g = cand
            break

    grid = (B // bt, m1 // g)

    in_specs = [
        pl.BlockSpec((g, bt, d_node), lambda b, k: (k, b, 0)),            # tn_t
        pl.BlockSpec((g, bt, T * d_task), lambda b, k: (k, b, 0)),        # td_lane
        pl.BlockSpec((bt, m2 * d_node), lambda b, k: (b, 0)),             # cn_flat
        pl.BlockSpec((bt, n_act), lambda b, k: (b, 0)),                   # action
        pl.BlockSpec((d_node, T * d_model), lambda b, k: (0, 0)),         # w_tn_rep
        pl.BlockSpec((T * d_task, T * d_model), lambda b, k: (0, 0)),     # w_td_blk
        pl.BlockSpec((m2 * d_node, m2 * d_model), lambda b, k: (0, 0)),   # w_cn_blk
        pl.BlockSpec((g, T * d_model, H), lambda b, k: (k, 0, 0)),        # w_seq (K-tiled)
        pl.BlockSpec((n_cn, H), lambda b, k: (0, 0)),                     # w_cnf
        pl.BlockSpec((n_act, H), lambda b, k: (0, 0)),                    # w_act
        pl.BlockSpec((1, H), lambda b, k: (0, 0)),                        # b_fc'
        pl.BlockSpec((H, 2 * d_model), lambda b, k: (0, 0)),              # w1
        pl.BlockSpec((1, 2 * d_model), lambda b, k: (0, 0)),              # b1
        pl.BlockSpec((1, 2 * d_model), lambda b, k: (0, 0)),              # w2 (row)
        pl.BlockSpec((1, 1), lambda b, k: (0, 0)),                        # b2
    ]
    out_spec = pl.BlockSpec((bt, 1), lambda b, k: (b, 0))

    flops = int(2 * B * (m1 * d_node * T * d_model
                         + m1 * (T * d_task) * (T * d_model)
                         + (m2 * d_node) * (m2 * d_model)
                         + m1 * T * d_model * H
                         + n_cn * H + n_act * H
                         + H * 2 * d_model + 2 * d_model))
    args = (tn_t, td_lane, cn_flat, act2, w_tn_rep, w_td_blk, w_cn_blk,
            w_seq_c, w_cnf_c, w_act_c, b_fc_f, w1_c, b1_f, w2_row, b2_f)
    bytes_accessed = sum(int(a.size) * jnp.dtype(a.dtype).itemsize for a in args)
    bytes_accessed += (B // bt - 1) * int(w_seq_c.size) * wi   # re-stream factor
    bytes_accessed += B * 4

    q = pl.pallas_call(
        functools.partial(_critic_fused_kernel, g, mxu_dtype),
        out_shape=jax.ShapeDtypeStruct((B, 1), jnp.float32),
        grid_spec=pltpu.PrefetchScalarGridSpec(
            num_scalar_prefetch=0,
            grid=grid,
            in_specs=in_specs,
            out_specs=out_spec,
            scratch_shapes=[pltpu.VMEM((bt, H), jnp.float32)],
        ),
        compiler_params=pltpu.CompilerParams(
            dimension_semantics=("parallel", "arbitrary"),
            vmem_limit_bytes=vmem_limit,
        ),
        cost_estimate=pl.CostEstimate(
            flops=flops, transcendentals=0, bytes_accessed=int(bytes_accessed)),
    )(*args)
    return q


# ----------------------------------------------------------------------------
# Deterministic parameter init (torch.nn.Linear-style U(-1/sqrt(fan_in), ...)).
# ----------------------------------------------------------------------------
def init_params(key, d_node, d_task, max_tasks, m1, m2, d_model):
    def linear(k, fan_in, fan_out):
        kw, kb = jax.random.split(k)
        bound = 1.0 / (fan_in ** 0.5)
        w = jax.random.uniform(kw, (fan_in, fan_out), jnp.float32, -bound, bound)
        b = jax.random.uniform(kb, (1, fan_out), jnp.float32, -bound, bound)
        return w, b

    keys = jax.random.split(key, 6)
    feat_dim = d_model * (m1 * max_tasks + m2) + m1 * max_tasks * (m2 + 1)
    return {
        "task_node":    linear(keys[0], d_node, d_model),
        "task_data":    linear(keys[1], d_task, d_model),
        "compute_node": linear(keys[2], d_node, d_model),
        "fc":           linear(keys[3], feat_dim, 4 * d_model),
        "score1":       linear(keys[4], 4 * d_model, 2 * d_model),
        "score2":       linear(keys[5], 2 * d_model, 1),
    }


# Pure-JAX reference mirroring the torch forward (for a sanity check).
def critic_forward_ref(params, task_node, task_data, compute_node,
                       task_mask, compute_node_mask, action,
                       *, d_node, d_task, max_tasks, m1, m2, d_model):
    del task_mask, compute_node_mask
    B = task_node.shape[0]
    (w_tn, b_tn) = params["task_node"]
    (w_td, b_td) = params["task_data"]
    (w_cn, b_cn) = params["compute_node"]
    (w_fc, b_fc) = params["fc"]
    (w1, b1) = params["score1"]
    (w2, b2) = params["score2"]

    tn_emb = task_node @ w_tn + b_tn                      # [B, m1, d_model]
    td_emb = task_data @ w_td + b_td                      # [B, m1, T, d_model]
    combined = tn_emb[:, :, None, :] + td_emb
    seq = combined.reshape(B, m1 * max_tasks, d_model)
    cn_emb = compute_node @ w_cn + b_cn                   # [B, m2, d_model]
    flat = jnp.concatenate([seq, cn_emb], axis=1).reshape(B, -1)
    x = jnp.concatenate([flat, action.reshape(B, -1)], axis=1)
    h = x @ w_fc + b_fc
    h = jnp.maximum(h @ w1 + b1, 0.0)
    return h @ w2 + b2


if __name__ == "__main__":
    # Small, forward-consistent shapes.
    B, m1, m2 = 2, 3, 3
    max_tasks = 4
    d_node, d_task, d_model = 8, 6, 32
    n_act = m1 * max_tasks * (m2 + 1)

    key = jax.random.PRNGKey(0)
    kp, k1, k2, k3, k4 = jax.random.split(key, 5)

    params = init_params(kp, d_node, d_task, max_tasks, m1, m2, d_model)

    task_node = jax.random.normal(k1, (B, m1, d_node), jnp.float32)
    task_data = jax.random.normal(k2, (B, m1, max_tasks, d_task), jnp.float32)
    compute_node = jax.random.normal(k3, (B, m2, d_node), jnp.float32)
    task_mask = jnp.ones((B, m1, max_tasks), jnp.float32)        # unused
    compute_node_mask = jnp.ones((B, m2), jnp.float32)           # unused
    action = jax.random.normal(k4, (B, n_act), jnp.float32)

    kwargs = dict(d_node=d_node, d_task=d_task, max_tasks=max_tasks,
                  m1=m1, m2=m2, d_model=d_model)

    q_ref = critic_forward_ref(params, task_node, task_data, compute_node,
                               task_mask, compute_node_mask, action, **kwargs)
    q_ref = jax.block_until_ready(q_ref)

    # f32-weight configuration: close parity with the reference (both run the
    # MXU at its default precision for f32 operands).
    q32 = critic_forward(params, task_node, task_data, compute_node,
                         task_mask, compute_node_mask, action,
                         mxu_dtype=jnp.float32, **kwargs)
    q32 = jax.block_until_ready(q32)
    assert q32.shape == (B, 1)
    assert jnp.allclose(q32, q_ref, atol=2e-2, rtol=2e-2), (q32, q_ref)

    # Default bf16-weight configuration (halves the dominant HBM stream).
    qbf = critic_forward(params, task_node, task_data, compute_node,
                         task_mask, compute_node_mask, action, **kwargs)
    qbf = jax.block_until_ready(qbf)
    assert qbf.shape == (B, 1)
    assert jnp.allclose(qbf, q_ref, atol=4e-2, rtol=4e-2), (qbf, q_ref)

    print("KERNEL_OK")
</pallas_src>

<mosaic_0001>
module attributes {stable_mosaic.version = 11 : i64} {
  func.func @_critic_fused_kernel(%arg0: i32, %arg1: i32, %arg2: memref<3x2x8xf32, #tpu.memory_space<vmem>>, %arg3: memref<3x2x24xf32, #tpu.memory_space<vmem>>, %arg4: memref<2x24xf32, #tpu.memory_space<vmem>>, %arg5: memref<2x48xf32, #tpu.memory_space<vmem>>, %arg6: memref<8x128xf32, #tpu.memory_space<vmem>>, %arg7: memref<24x128xf32, #tpu.memory_space<vmem>>, %arg8: memref<24x96xf32, #tpu.memory_space<vmem>>, %arg9: memref<3x128x128xf32, #tpu.memory_space<vmem>>, %arg10: memref<96x128xf32, #tpu.memory_space<vmem>>, %arg11: memref<48x128xf32, #tpu.memory_space<vmem>>, %arg12: memref<1x128xf32, #tpu.memory_space<vmem>>, %arg13: memref<128x64xf32, #tpu.memory_space<vmem>>, %arg14: memref<1x64xf32, #tpu.memory_space<vmem>>, %arg15: memref<1x64xf32, #tpu.memory_space<vmem>>, %arg16: memref<1x1xf32, #tpu.memory_space<vmem>>, %arg17: memref<2x1xf32, #tpu.memory_space<vmem>>, %arg18: memref<2x128xf32, #tpu.memory_space<vmem>>) attributes {dimension_semantics = [#tpu.dimension_semantics<parallel>, #tpu.dimension_semantics<arbitrary>], iteration_bounds = array<i64: 1, 1>, scalar_prefetch = 0 : i64, scratch_operands = 1 : i64, tpu.core_type = #tpu.core_type<tc>, window_params = [{transform_indices = @transform_0, window_bounds = array<i64: 3, 2, 8>}, {transform_indices = @transform_1, window_bounds = array<i64: 3, 2, 24>}, {transform_indices = @transform_2, window_bounds = array<i64: 2, 24>}, {transform_indices = @transform_3, window_bounds = array<i64: 2, 48>}, {pipeline_mode = #tpu.pipeline_mode<synchronous>, transform_indices = @transform_4, window_bounds = array<i64: 8, 128>}, {pipeline_mode = #tpu.pipeline_mode<synchronous>, transform_indices = @transform_5, window_bounds = array<i64: 24, 128>}, {pipeline_mode = #tpu.pipeline_mode<synchronous>, transform_indices = @transform_6, window_bounds = array<i64: 24, 96>}, {transform_indices = @transform_7, window_bounds = array<i64: 3, 128, 128>}, {pipeline_mode = #tpu.pipeline_mode<synchronous>, transform_indices = @transform_8, window_bounds = array<i64: 96, 128>}, {pipeline_mode = #tpu.pipeline_mode<synchronous>, transform_indices = @transform_9, window_bounds = array<i64: 48, 128>}, {pipeline_mode = #tpu.pipeline_mode<synchronous>, transform_indices = @transform_10, window_bounds = array<i64: 1, 128>}, {pipeline_mode = #tpu.pipeline_mode<synchronous>, transform_indices = @transform_11, window_bounds = array<i64: 128, 64>}, {pipeline_mode = #tpu.pipeline_mode<synchronous>, transform_indices = @transform_12, window_bounds = array<i64: 1, 64>}, {pipeline_mode = #tpu.pipeline_mode<synchronous>, transform_indices = @transform_13, window_bounds = array<i64: 1, 64>}, {pipeline_mode = #tpu.pipeline_mode<synchronous>, transform_indices = @transform_14, window_bounds = array<i64: 1, 1>}, {transform_indices = @transform_15, window_bounds = array<i64: 2, 1>}]} {
    %c0_i32 = arith.constant 0 : i32
    %0 = arith.cmpi eq, %arg1, %c0_i32 : i32
    %1 = arith.extui %0 : i1 to i32
    %c0_i32_0 = arith.constant 0 : i32
    %2 = arith.cmpi ne, %1, %c0_i32_0 : i32
    scf.if %2 {
      %c0_51 = arith.constant 0 : index
      %c0_52 = arith.constant 0 : index
      %47 = vector.load %arg5[%c0_51, %c0_52] : memref<2x48xf32, #tpu.memory_space<vmem>>, vector<2x48xf32>
      %c0_53 = arith.constant 0 : index
      %c0_54 = arith.constant 0 : index
      %48 = vector.load %arg11[%c0_53, %c0_54] : memref<48x128xf32, #tpu.memory_space<vmem>>, vector<48x128xf32>
      %cst_55 = arith.constant dense<0.000000e+00> : vector<2x128xf32>
      %49 = tpu.matmul %47, %48, %cst_55 {dimension_numbers = #tpu.dot_dimension_numbers<[1], [0], [0], [1], [0, 0, 1, 1], [], []>} : vector<2x48xf32>, vector<48x128xf32>, vector<2x128xf32> -> vector<2x128xf32>
      %c0_56 = arith.constant 0 : index
      %c0_57 = arith.constant 0 : index
      %50 = vector.load %arg12[%c0_56, %c0_57] : memref<1x128xf32, #tpu.memory_space<vmem>>, vector<1x128xf32>
      %51 = vector.broadcast %50 : vector<1x128xf32> to vector<2x128xf32>
      %52 = arith.addf %49, %51 : vector<2x128xf32>
      %c0_58 = arith.constant 0 : index
      %c0_59 = arith.constant 0 : index
      %53 = vector.load %arg4[%c0_58, %c0_59] : memref<2x24xf32, #tpu.memory_space<vmem>>, vector<2x24xf32>
      %c0_60 = arith.constant 0 : index
      %c0_61 = arith.constant 0 : index
      %54 = vector.load %arg8[%c0_60, %c0_61] : memref<24x96xf32, #tpu.memory_space<vmem>>, vector<24x96xf32>
      %cst_62 = arith.constant dense<0.000000e+00> : vector<2x96xf32>
      %55 = tpu.matmul %53, %54, %cst_62 {dimension_numbers = #tpu.dot_dimension_numbers<[1], [0], [0], [1], [0, 0, 1, 1], [], []>} : vector<2x24xf32>, vector<24x96xf32>, vector<2x96xf32> -> vector<2x96xf32>
      %c0_63 = arith.constant 0 : index
      %c0_64 = arith.constant 0 : index
      %56 = vector.load %arg10[%c0_63, %c0_64] : memref<96x128xf32, #tpu.memory_space<vmem>>, vector<96x128xf32>
      %cst_65 = arith.constant dense<0.000000e+00> : vector<2x128xf32>
      %57 = tpu.matmul %55, %56, %cst_65 {dimension_numbers = #tpu.dot_dimension_numbers<[1], [0], [0], [1], [0, 0, 1, 1], [], []>} : vector<2x96xf32>, vector<96x128xf32>, vector<2x128xf32> -> vector<2x128xf32>
      %58 = arith.addf %52, %57 : vector<2x128xf32>
      %c0_66 = arith.constant 0 : index
      %c0_67 = arith.constant 0 : index
      %59 = vector.load %arg18[%c0_66, %c0_67] : memref<2x128xf32, #tpu.memory_space<vmem>>, vector<2x128xf32>
      tpu.vector_store %arg18[%c0_66, %c0_67], %58 {strides = array<i32>} : memref<2x128xf32, #tpu.memory_space<vmem>>, vector<2x128xf32>,
    } else {
    }
    %c0 = arith.constant 0 : index
    %c0_1 = arith.constant 0 : index
    %3 = vector.load %arg18[%c0, %c0_1] : memref<2x128xf32, #tpu.memory_space<vmem>>, vector<2x128xf32>
    %c0_2 = arith.constant 0 : index
    %c0_3 = arith.constant 0 : index
    %c0_4 = arith.constant 0 : index
    %4 = vector.load %arg2[%c0_2, %c0_3, %c0_4] : memref<3x2x8xf32, #tpu.memory_space<vmem>>, vector<1x2x8xf32>
    %5 = vector.shape_cast %4 : vector<1x2x8xf32> to vector<2x8xf32>
    %c0_5 = arith.constant 0 : index
    %c0_6 = arith.constant 0 : index
    %6 = vector.load %arg6[%c0_5, %c0_6] : memref<8x128xf32, #tpu.memory_space<vmem>>, vector<8x128xf32>
    %cst = arith.constant dense<0.000000e+00> : vector<2x128xf32>
    %7 = tpu.matmul %5, %6, %cst {dimension_numbers = #tpu.dot_dimension_numbers<[1], [0], [0], [1], [0, 0, 1, 1], [], []>} : vector<2x8xf32>, vector<8x128xf32>, vector<2x128xf32> -> vector<2x128xf32>
    %c0_7 = arith.constant 0 : index
    %c0_8 = arith.constant 0 : index
    %c0_9 = arith.constant 0 : index
    %8 = vector.load %arg3[%c0_7, %c0_8, %c0_9] : memref<3x2x24xf32, #tpu.memory_space<vmem>>, vector<1x2x24xf32>
    %9 = vector.shape_cast %8 : vector<1x2x24xf32> to vector<2x24xf32>
    %c0_10 = arith.constant 0 : index
    %c0_11 = arith.constant 0 : index
    %10 = vector.load %arg7[%c0_10, %c0_11] : memref<24x128xf32, #tpu.memory_space<vmem>>, vector<24x128xf32>
    %cst_12 = arith.constant dense<0.000000e+00> : vector<2x128xf32>
    %11 = tpu.matmul %9, %10, %cst_12 {dimension_numbers = #tpu.dot_dimension_numbers<[1], [0], [0], [1], [0, 0, 1, 1], [], []>} : vector<2x24xf32>, vector<24x128xf32>, vector<2x128xf32> -> vector<2x128xf32>
    %12 = arith.addf %7, %11 : vector<2x128xf32>
    %c0_13 = arith.constant 0 : index
    %c0_14 = arith.constant 0 : index
    %c0_15 = arith.constant 0 : index
    %13 = vector.load %arg9[%c0_13, %c0_14, %c0_15] : memref<3x128x128xf32, #tpu.memory_space<vmem>>, vector<1x128x128xf32>
    %14 = vector.shape_cast %13 : vector<1x128x128xf32> to vector<128x128xf32>
    %cst_16 = arith.constant dense<0.000000e+00> : vector<2x128xf32>
    %15 = tpu.matmul %12, %14, %cst_16 {dimension_numbers = #tpu.dot_dimension_numbers<[1], [0], [0], [1], [0, 0, 1, 1], [], []>} : vector<2x128xf32>, vector<128x128xf32>, vector<2x128xf32> -> vector<2x128xf32>
    %16 = arith.addf %3, %15 : vector<2x128xf32>
    %c1 = arith.constant 1 : index
    %c0_17 = arith.constant 0 : index
    %c0_18 = arith.constant 0 : index
    %17 = vector.load %arg2[%c1, %c0_17, %c0_18] : memref<3x2x8xf32, #tpu.memory_space<vmem>>, vector<1x2x8xf32>
    %18 = vector.shape_cast %17 : vector<1x2x8xf32> to vector<2x8xf32>
    %c0_19 = arith.constant 0 : index
    %c0_20 = arith.constant 0 : index
    %19 = vector.load %arg6[%c0_19, %c0_20] : memref<8x128xf32, #tpu.memory_space<vmem>>, vector<8x128xf32>
    %cst_21 = arith.constant dense<0.000000e+00> : vector<2x128xf32>
    %20 = tpu.matmul %18, %19, %cst_21 {dimension_numbers = #tpu.dot_dimension_numbers<[1], [0], [0], [1], [0, 0, 1, 1], [], []>} : vector<2x8xf32>, vector<8x128xf32>, vector<2x128xf32> -> vector<2x128xf32>
    %c1_22 = arith.constant 1 : index
    %c0_23 = arith.constant 0 : index
    %c0_24 = arith.constant 0 : index
    %21 = vector.load %arg3[%c1_22, %c0_23, %c0_24] : memref<3x2x24xf32, #tpu.memory_space<vmem>>, vector<1x2x24xf32>
    %22 = vector.shape_cast %21 : vector<1x2x24xf32> to vector<2x24xf32>
    %c0_25 = arith.constant 0 : index
    %c0_26 = arith.constant 0 : index
    %23 = vector.load %arg7[%c0_25, %c0_26] : memref<24x128xf32, #tpu.memory_space<vmem>>, vector<24x128xf32>
    %cst_27 = arith.constant dense<0.000000e+00> : vector<2x128xf32>
    %24 = tpu.matmul %22, %23, %cst_27 {dimension_numbers = #tpu.dot_dimension_numbers<[1], [0], [0], [1], [0, 0, 1, 1], [], []>} : vector<2x24xf32>, vector<24x128xf32>, vector<2x128xf32> -> vector<2x128xf32>
    %25 = arith.addf %20, %24 : vector<2x128xf32>
    %c1_28 = arith.constant 1 : index
    %c0_29 = arith.constant 0 : index
    %c0_30 = arith.constant 0 : index
    %26 = vector.load %arg9[%c1_28, %c0_29, %c0_30] : memref<3x128x128xf32, #tpu.memory_space<vmem>>, vector<1x128x128xf32>
    %27 = vector.shape_cast %26 : vector<1x128x128xf32> to vector<128x128xf32>
    %cst_31 = arith.constant dense<0.000000e+00> : vector<2x128xf32>
    %28 = tpu.matmul %25, %27, %cst_31 {dimension_numbers = #tpu.dot_dimension_numbers<[1], [0], [0], [1], [0, 0, 1, 1], [], []>} : vector<2x128xf32>, vector<128x128xf32>, vector<2x128xf32> -> vector<2x128xf32>
    %29 = arith.addf %16, %28 : vector<2x128xf32>
    %c2 = arith.constant 2 : index
    %c0_32 = arith.constant 0 : index
    %c0_33 = arith.constant 0 : index
    %30 = vector.load %arg2[%c2, %c0_32, %c0_33] : memref<3x2x8xf32, #tpu.memory_space<vmem>>, vector<1x2x8xf32>
    %31 = vector.shape_cast %30 : vector<1x2x8xf32> to vector<2x8xf32>
    %c0_34 = arith.constant 0 : index
    %c0_35 = arith.constant 0 : index
    %32 = vector.load %arg6[%c0_34, %c0_35] : memref<8x128xf32, #tpu.memory_space<vmem>>, vector<8x128xf32>
    %cst_36 = arith.constant dense<0.000000e+00> : vector<2x128xf32>
    %33 = tpu.matmul %31, %32, %cst_36 {dimension_numbers = #tpu.dot_dimension_numbers<[1], [0], [0], [1], [0, 0, 1, 1], [], []>} : vector<2x8xf32>, vector<8x128xf32>, vector<2x128xf32> -> vector<2x128xf32>
    %c2_37 = arith.constant 2 : index
    %c0_38 = arith.constant 0 : index
    %c0_39 = arith.constant 0 : index
    %34 = vector.load %arg3[%c2_37, %c0_38, %c0_39] : memref<3x2x24xf32, #tpu.memory_space<vmem>>, vector<1x2x24xf32>
    %35 = vector.shape_cast %34 : vector<1x2x24xf32> to vector<2x24xf32>
    %c0_40 = arith.constant 0 : index
    %c0_41 = arith.constant 0 : index
    %36 = vector.load %arg7[%c0_40, %c0_41] : memref<24x128xf32, #tpu.memory_space<vmem>>, vector<24x128xf32>
    %cst_42 = arith.constant dense<0.000000e+00> : vector<2x128xf32>
    %37 = tpu.matmul %35, %36, %cst_42 {dimension_numbers = #tpu.dot_dimension_numbers<[1], [0], [0], [1], [0, 0, 1, 1], [], []>} : vector<2x24xf32>, vector<24x128xf32>, vector<2x128xf32> -> vector<2x128xf32>
    %38 = arith.addf %33, %37 : vector<2x128xf32>
    %c2_43 = arith.constant 2 : index
    %c0_44 = arith.constant 0 : index
    %c0_45 = arith.constant 0 : index
    %39 = vector.load %arg9[%c2_43, %c0_44, %c0_45] : memref<3x128x128xf32, #tpu.memory_space<vmem>>, vector<1x128x128xf32>
    %40 = vector.shape_cast %39 : vector<1x128x128xf32> to vector<128x128xf32>
    %cst_46 = arith.constant dense<0.000000e+00> : vector<2x128xf32>
    %41 = tpu.matmul %38, %40, %cst_46 {dimension_numbers = #tpu.dot_dimension_numbers<[1], [0], [0], [1], [0, 0, 1, 1], [], []>} : vector<2x128xf32>, vector<128x128xf32>, vector<2x128xf32> -> vector<2x128xf32>
    %42 = arith.addf %29, %41 : vector<2x128xf32>
    %c0_47 = arith.constant 0 : index
    %c0_48 = arith.constant 0 : index
    %43 = vector.load %arg18[%c0_47, %c0_48] : memref<2x128xf32, #tpu.memory_space<vmem>>, vector<2x128xf32>
    tpu.vector_store %arg18[%c0_47, %c0_48], %42 {strides = array<i32>} : memref<2x128xf32, #tpu.memory_space<vmem>>, vector<2x128xf32>,
    %c0_i32_49 = arith.constant 0 : i32
    %44 = arith.cmpi eq, %arg1, %c0_i32_49 : i32
    %45 = arith.extui %44 : i1 to i32
    %c0_i32_50 = arith.constant 0 : i32
    %46 = arith.cmpi ne, %45, %c0_i32_50 : i32
    scf.if %46 {
      %c0_51 = arith.constant 0 : index
      %c0_52 = arith.constant 0 : index
      %47 = vector.load %arg18[%c0_51, %c0_52] : memref<2x128xf32, #tpu.memory_space<vmem>>, vector<2x128xf32>
      %c0_53 = arith.constant 0 : index
      %c0_54 = arith.constant 0 : index
      %48 = vector.load %arg13[%c0_53, %c0_54] : memref<128x64xf32, #tpu.memory_space<vmem>>, vector<128x64xf32>
      %cst_55 = arith.constant dense<0.000000e+00> : vector<2x64xf32>
      %49 = tpu.matmul %47, %48, %cst_55 {dimension_numbers = #tpu.dot_dimension_numbers<[1], [0], [0], [1], [0, 0, 1, 1], [], []>} : vector<2x128xf32>, vector<128x64xf32>, vector<2x64xf32> -> vector<2x64xf32>
      %c0_56 = arith.constant 0 : index
      %c0_57 = arith.constant 0 : index
      %50 = vector.load %arg14[%c0_56, %c0_57] : memref<1x64xf32, #tpu.memory_space<vmem>>, vector<1x64xf32>
      %51 = vector.broadcast %50 : vector<1x64xf32> to vector<2x64xf32>
      %52 = arith.addf %49, %51 : vector<2x64xf32>
      %cst_58 = arith.constant 0.000000e+00 : f32
      %53 = vector.broadcast %cst_58 : f32 to vector<2x64xf32>
      %54 = arith.maximumf %52, %53 : vector<2x64xf32>
      %c0_59 = arith.constant 0 : index
      %c0_60 = arith.constant 0 : index
      %55 = vector.load %arg15[%c0_59, %c0_60] : memref<1x64xf32, #tpu.memory_space<vmem>>, vector<1x64xf32>
      %56 = vector.broadcast %55 : vector<1x64xf32> to vector<2x64xf32>
      %57 = arith.mulf %54, %56 : vector<2x64xf32>
      %cst_61 = arith.constant dense<0.000000e+00> : vector<2xf32>
      %58 = vector.multi_reduction <add>, %57, %cst_61 [1] : vector<2x64xf32> to vector<2xf32>
      %59 = vector.shape_cast %58 : vector<2xf32> to vector<2x1xf32>
      %c0_62 = arith.constant 0 : index
      %c0_63 = arith.constant 0 : index
      %60 = vector.load %arg16[%c0_62, %c0_63] : memref<1x1xf32, #tpu.memory_space<vmem>>, vector<1x1xf32>
      %61 = vector.broadcast %60 : vector<1x1xf32> to vector<2x1xf32>
      %62 = arith.addf %59, %61 : vector<2x1xf32>
      %c0_64 = arith.constant 0 : index
      %c0_65 = arith.constant 0 : index
      %63 = vector.load %arg17[%c0_64, %c0_65] : memref<2x1xf32, #tpu.memory_space<vmem>>, vector<2x1xf32>
      tpu.vector_store %arg17[%c0_64, %c0_65], %62 {strides = array<i32>} : memref<2x1xf32, #tpu.memory_space<vmem>>, vector<2x1xf32>,
    } else {
    }
    return
  }
  func.func @transform_0(%arg0: i32, %arg1: i32) -> (i32, i32, i32) {
    %c0_i32 = arith.constant 0 : i32
    %c0_i32_0 = arith.constant 0 : i32
    return %arg1, %arg0, %c0_i32 : i32, i32, i32
  }
  func.func @transform_1(%arg0: i32, %arg1: i32) -> (i32, i32, i32) {
    %c0_i32 = arith.constant 0 : i32
    %c0_i32_0 = arith.constant 0 : i32
    return %arg1, %arg0, %c0_i32 : i32, i32, i32
  }
  func.func @transform_2(%arg0: i32, %arg1: i32) -> (i32, i32) {
    %c0_i32 = arith.constant 0 : i32
    %c0_i32_0 = arith.constant 0 : i32
    return %arg0, %c0_i32 : i32, i32
  }
  func.func @transform_3(%arg0: i32, %arg1: i32) -> (i32, i32) {
    %c0_i32 = arith.constant 0 : i32
    %c0_i32_0 = arith.constant 0 : i32
    return %arg0, %c0_i32 : i32, i32
  }
  func.func @transform_4(%arg0: i32, %arg1: i32) -> (i32, i32) {
    %c0_i32 = arith.constant 0 : i32
    %c0_i32_0 = arith.constant 0 : i32
    %c0_i32_1 = arith.constant 0 : i32
    return %c0_i32, %c0_i32_0 : i32, i32
  }
  func.func @transform_5(%arg0: i32, %arg1: i32) -> (i32, i32) {
    %c0_i32 = arith.constant 0 : i32
    %c0_i32_0 = arith.constant 0 : i32
    %c0_i32_1 = arith.constant 0 : i32
    return %c0_i32, %c0_i32_0 : i32, i32
  }
  func.func @transform_6(%arg0: i32, %arg1: i32) -> (i32, i32) {
    %c0_i32 = arith.constant 0 : i32
    %c0_i32_0 = arith.constant 0 : i32
    %c0_i32_1 = arith.constant 0 : i32
    return %c0_i32, %c0_i32_0 : i32, i32
  }
  func.func @transform_7(%arg0: i32, %arg1: i32) -> (i32, i32, i32) {
    %c0_i32 = arith.constant 0 : i32
    %c0_i32_0 = arith.constant 0 : i32
    %c0_i32_1 = arith.constant 0 : i32
    return %arg1, %c0_i32, %c0_i32_0 : i32, i32, i32
  }
  func.func @transform_8(%arg0: i32, %arg1: i32) -> (i32, i32) {
    %c0_i32 = arith.constant 0 : i32
    %c0_i32_0 = arith.constant 0 : i32
    %c0_i32_1 = arith.constant 0 : i32
    return %c0_i32, %c0_i32_0 : i32, i32
  }
  func.func @transform_9(%arg0: i32, %arg1: i32) -> (i32, i32) {
    %c0_i32 = arith.constant 0 : i32
    %c0_i32_0 = arith.constant 0 : i32
    %c0_i32_1 = arith.constant 0 : i32
    return %c0_i32, %c0_i32_0 : i32, i32
  }
  func.func @transform_10(%arg0: i32, %arg1: i32) -> (i32, i32) {
    %c0_i32 = arith.constant 0 : i32
    %c0_i32_0 = arith.constant 0 : i32
    %c0_i32_1 = arith.constant 0 : i32
    return %c0_i32, %c0_i32_0 : i32, i32
  }
  func.func @transform_11(%arg0: i32, %arg1: i32) -> (i32, i32) {
    %c0_i32 = arith.constant 0 : i32
    %c0_i32_0 = arith.constant 0 : i32
    %c0_i32_1 = arith.constant 0 : i32
    return %c0_i32, %c0_i32_0 : i32, i32
  }
  func.func @transform_12(%arg0: i32, %arg1: i32) -> (i32, i32) {
    %c0_i32 = arith.constant 0 : i32
    %c0_i32_0 = arith.constant 0 : i32
    %c0_i32_1 = arith.constant 0 : i32
    return %c0_i32, %c0_i32_0 : i32, i32
  }
  func.func @transform_13(%arg0: i32, %arg1: i32) -> (i32, i32) {
    %c0_i32 = arith.constant 0 : i32
    %c0_i32_0 = arith.constant 0 : i32
    %c0_i32_1 = arith.constant 0 : i32
    return %c0_i32, %c0_i32_0 : i32, i32
  }
  func.func @transform_14(%arg0: i32, %arg1: i32) -> (i32, i32) {
    %c0_i32 = arith.constant 0 : i32
    %c0_i32_0 = arith.constant 0 : i32
    %c0_i32_1 = arith.constant 0 : i32
    return %c0_i32, %c0_i32_0 : i32, i32
  }
  func.func @transform_15(%arg0: i32, %arg1: i32) -> (i32, i32) {
    %c0_i32 = arith.constant 0 : i32
    %c0_i32_0 = arith.constant 0 : i32
    return %arg0, %c0_i32 : i32, i32
  }
}

</mosaic_0001>

<llo_original>
// kernel: tpu_custom_call.1
$region0: #{tpu_custom_call.1}
  #allocation0 [shape = 'u32[]', space=smem, size = 0x4, offset = 0x4, fixed_abs, tag = 'smem constant byte address 0x4 - core index']
  #allocation1 [shape = 'u32[144,128]{1,0:T(1,128)}', space=vmem, size = 0x12000, scoped, tag = 'internal scratch']
  #allocation2 [shape = 'f32[2,128]{1,0:T(2,128)}', space=vmem, size = 0x400, scoped, tag = 'scratch operand']
  #allocation3 [shape = 'f32[1,1]{1,0:T(1,128)S(1)}', space=vmem, size = 0x200, scoped, tag = 'scoped memory for tpu_custom_call.1']
  %s0 = inlined_call_operand.hbm [shape: f32[3,2,8], index: 0, kind: input, shape index: {}]
  %s1 = inlined_call_operand.hbm [shape: f32[3,2,24], index: 1, kind: input, shape index: {}]
  %s2 = inlined_call_operand.vmem [shape: f32[2,24], index: 2, kind: input, shape index: {}]
  %s3 = inlined_call_operand.vmem [shape: f32[2,48], index: 3, kind: input, shape index: {}]
  %s4 = inlined_call_operand.vmem [shape: f32[8,128], index: 4, kind: input, shape index: {}]
  %s5 = inlined_call_operand.vmem [shape: f32[24,128], index: 5, kind: input, shape index: {}]
  %s6 = inlined_call_operand.vmem [shape: f32[24,96], index: 6, kind: input, shape index: {}]
  %s7 = inlined_call_operand.hbm [shape: f32[3,128,128], index: 7, kind: input, shape index: {}]
  %s8 = inlined_call_operand.vmem [shape: f32[96,128], index: 8, kind: input, shape index: {}]
  %s9 = inlined_call_operand.vmem [shape: f32[48,128], index: 9, kind: input, shape index: {}]
  %s10 = inlined_call_operand.vmem [shape: f32[1,128], index: 10, kind: input, shape index: {}]
  %s11 = inlined_call_operand.vmem [shape: f32[128,64], index: 11, kind: input, shape index: {}]
  %s12 = inlined_call_operand.vmem [shape: f32[1,64], index: 12, kind: input, shape index: {}]
  %s13 = inlined_call_operand.vmem [shape: f32[1,64], index: 13, kind: input, shape index: {}]
  %s14 = inlined_call_operand.<no memory space> [shape: f32[1,1], index: 14, kind: input, shape index: {}]
  %s15 = inlined_call_operand.vmem [shape: f32[2,1], index: 15, kind: output, shape index: {}]
  %s16 = sld [smem:[#allocation0]]
  $region90: #{tpu_custom_call.1} parent=0
    _
  %s18 = ssub.s32 1, %s16
  %s19 = scalar_select 0, %s18, %s16
  %v20 = vstv %s14
  %21 = vst [vmem:[#allocation3] sm:$0x1] %v20
  $region1: #{tpu_custom_call.1} parent=0
    #allocation4 [shape = 'u8[3072]{0}', space=vmem, size = 0xc00, scoped, tag = 'input window, operand 0, single buffered']
    #allocation5 [shape = 's32[1]{0}', space=sflag, size = 0x4, scoped, tag = 'scoped memory for tpu_custom_call.1']
    #allocation6 [shape = 'u8[3072]{0}', space=vmem, size = 0xc00, scoped, tag = 'input window, operand 1, single buffered']
    #allocation7 [shape = 's32[1]{0}', space=sflag, size = 0x4, scoped, tag = 'scoped memory for tpu_custom_call.1']
    #allocation8 [shape = 'u8[196608]{0}', space=vmem, size = 0x30000, scoped, tag = 'input window, operand 7, single buffered']
    %22 = vsyncpa [#allocation5], 0
    %23 = vsyncpa [#allocation7], 0
    // Predicated region
    $region2: #{tpu_custom_call.1} parent=1 // pred_check
      _
    $region3: #{tpu_custom_call.1} parent=1 // pred_check_branch
      %25 = sbr.rel (0) target = $region5
    $region4: #{tpu_custom_call.1} parent=1 // pred_region
      %s27 = ssub.s32 96, 96
      %28 = vsyncadd [#allocation5], %s27
      %s29 = sshll.u32 [#allocation4], 4
      %s30 = int_to_ptr.vmem [resolvable:$true] %s29
      %35 = dma.hbm_to_vmem [thread:$0]  %s0, 96, %s30, [#allocation5], 32, 32, 2
    $region5: #{tpu_custom_call.1} parent=1 // pred_fallthru
      _
    // Predicated region
    $region6: #{tpu_custom_call.1} parent=1 // pred_check
      _
    $region7: #{tpu_custom_call.1} parent=1 // pred_check_branch
      %37 = sbr.rel (0) target = $region9
    $region8: #{tpu_custom_call.1} parent=1 // pred_region
      %s39 = ssub.s32 96, 96
      %40 = vsyncadd [#allocation7], %s39
      %s41 = sshll.u32 [#allocation6], 4
      %s42 = int_to_ptr.vmem [resolvable:$true] %s41
      %47 = dma.hbm_to_vmem [thread:$0]  %s1, 96, %s42, [#allocation7], 32, 32, 2
    $region9: #{tpu_custom_call.1} parent=1 // pred_fallthru
      _
    // Predicated region
    $region10: #{tpu_custom_call.1} parent=1 // pred_check
      _
    $region11: #{tpu_custom_call.1} parent=1 // pred_check_branch
      %49 = sbr.rel (0) target = $region13
    $region12: #{tpu_custom_call.1} parent=1 // pred_region
      _
    $region13: #{tpu_custom_call.1} parent=1 // pred_fallthru
      _
    // Predicated region
    $region14: #{tpu_custom_call.1} parent=1 // pred_check
      _
    $region15: #{tpu_custom_call.1} parent=1 // pred_check_branch
      %51 = sbr.rel (0) target = $region17
    $region16: #{tpu_custom_call.1} parent=1 // pred_region
      _
    $region17: #{tpu_custom_call.1} parent=1 // pred_fallthru
      _
    // Predicated region
    $region18: #{tpu_custom_call.1} parent=1 // pred_check
      _
    $region19: #{tpu_custom_call.1} parent=1 // pred_check_branch
      %53 = sbr.rel (0) target = $region21
    $region20: #{tpu_custom_call.1} parent=1 // pred_region
      _
    $region21: #{tpu_custom_call.1} parent=1 // pred_fallthru
      _
    // Predicated region
    $region22: #{tpu_custom_call.1} parent=1 // pred_check
      _
    $region23: #{tpu_custom_call.1} parent=1 // pred_check_branch
      %55 = sbr.rel (0) target = $region25
    $region24: #{tpu_custom_call.1} parent=1 // pred_region
      _
    $region25: #{tpu_custom_call.1} parent=1 // pred_fallthru
      _
    // Predicated region
    $region26: #{tpu_custom_call.1} parent=1 // pred_check
      _
    $region27: #{tpu_custom_call.1} parent=1 // pred_check_branch
      %57 = sbr.rel (0) target = $region29
    $region28: #{tpu_custom_call.1} parent=1 // pred_region
      _
    $region29: #{tpu_custom_call.1} parent=1 // pred_fallthru
      _
    // Predicated region
    $region30: #{tpu_custom_call.1} parent=1 // pred_check
      _
    $region31: #{tpu_custom_call.1} parent=1 // pred_check_branch
      %59 = sbr.rel (0) target = $region33
    $region32: #{tpu_custom_call.1} parent=1 // pred_region
      %s61 = ssub.s32 6144, 6144
      %62 = vsyncadd [#allocation7], %s61
      %s63 = sshll.u32 [#allocation8], 4
      %s64 = int_to_ptr.vmem [resolvable:$true] %s63
      %69 = dma.hbm_to_vmem [thread:$0]  %s7, 6144, %s64, [#allocation7], 128, 128, 8
    $region33: #{tpu_custom_call.1} parent=1 // pred_fallthru
      _
    // Predicated region
    $region34: #{tpu_custom_call.1} parent=1 // pred_check
      _
    $region35: #{tpu_custom_call.1} parent=1 // pred_check_branch
      %71 = sbr.rel (0) target = $region37
    $region36: #{tpu_custom_call.1} parent=1 // pred_region
      _
    $region37: #{tpu_custom_call.1} parent=1 // pred_fallthru
      _
    // Predicated region
    $region38: #{tpu_custom_call.1} parent=1 // pred_check
      _
    $region39: #{tpu_custom_call.1} parent=1 // pred_check_branch
      %73 = sbr.rel (0) target = $region41
    $region40: #{tpu_custom_call.1} parent=1 // pred_region
      _
    $region41: #{tpu_custom_call.1} parent=1 // pred_fallthru
      _
    // Predicated region
    $region42: #{tpu_custom_call.1} parent=1 // pred_check
      _
    $region43: #{tpu_custom_call.1} parent=1 // pred_check_branch
      %75 = sbr.rel (0) target = $region45
    $region44: #{tpu_custom_call.1} parent=1 // pred_region
      _
    $region45: #{tpu_custom_call.1} parent=1 // pred_fallthru
      _
    // Predicated region
    $region46: #{tpu_custom_call.1} parent=1 // pred_check
      _
    $region47: #{tpu_custom_call.1} parent=1 // pred_check_branch
      %77 = sbr.rel (0) target = $region49
    $region48: #{tpu_custom_call.1} parent=1 // pred_region
      _
    $region49: #{tpu_custom_call.1} parent=1 // pred_fallthru
      _
    // Predicated region
    $region50: #{tpu_custom_call.1} parent=1 // pred_check
      _
    $region51: #{tpu_custom_call.1} parent=1 // pred_check_branch
      %79 = sbr.rel (0) target = $region53
    $region52: #{tpu_custom_call.1} parent=1 // pred_region
      _
    $region53: #{tpu_custom_call.1} parent=1 // pred_fallthru
      _
    // Predicated region
    $region54: #{tpu_custom_call.1} parent=1 // pred_check
      _
    $region55: #{tpu_custom_call.1} parent=1 // pred_check_branch
      %81 = sbr.rel (0) target = $region57
    $region56: #{tpu_custom_call.1} parent=1 // pred_region
      _
    $region57: #{tpu_custom_call.1} parent=1 // pred_fallthru
      _
    // Predicated region
    $region58: #{tpu_custom_call.1} parent=1 // pred_check
      _
    $region59: #{tpu_custom_call.1} parent=1 // pred_check_branch
      %83 = sbr.rel (0) target = $region61
    $region60: #{tpu_custom_call.1} parent=1 // pred_region
      _
    $region61: #{tpu_custom_call.1} parent=1 // pred_fallthru
      _
    // Predicated region
    $region62: #{tpu_custom_call.1} parent=1 // pred_check
      _
    $region63: #{tpu_custom_call.1} parent=1 // pred_check_branch
      %85 = sbr.rel (0) target = $region65
    $region64: #{tpu_custom_call.1} parent=1 // pred_region
      %86 = dma.done [#allocation5], 96
    $region65: #{tpu_custom_call.1} parent=1 // pred_fallthru
      _
    // Predicated region
    $region66: #{tpu_custom_call.1} parent=1 // pred_check
      _
    $region67: #{tpu_custom_call.1} parent=1 // pred_check_branch
      %88 = sbr.rel (0) target = $region69
    $region68: #{tpu_custom_call.1} parent=1 // pred_region
      %89 = dma.done [#allocation7], 96
    $region69: #{tpu_custom_call.1} parent=1 // pred_fallthru
      _
    // Predicated region
    $region70: #{tpu_custom_call.1} parent=1 // pred_check
      _
    $region71: #{tpu_custom_call.1} parent=1 // pred_check_branch
      %91 = sbr.rel (0) target = $region73
    $region72: #{tpu_custom_call.1} parent=1 // pred_region
      %92 = dma.done [#allocation7], 6144
    $region73: #{tpu_custom_call.1} parent=1 // pred_fallthru
      _
    %p93 = scmp.eq.s32.totalorder 0, 0
    // Predicated region
    $region74: #{tpu_custom_call.1} parent=1 // pred_check
      %p94 = pneg %p93
    $region75: #{tpu_custom_call.1} parent=1 // pred_check_branch
      %96 = sbr.rel (%p94) target = $region77
    $region76: #{tpu_custom_call.1} parent=1 // pred_region
      %v97 = vld [vmem:[%s3] sm:$0x3]
      %v98 = vld [vmem:[%s9] sm:$0xff]
      %v99 = vld [vmem:[%s9 + $0x8] sm:$0xff]
      %v100 = vld [vmem:[%s9 + $0x10] sm:$0xff]
      %v101 = vld [vmem:[%s9 + $0x18] sm:$0xff]
      %v102 = vld [vmem:[%s9 + $0x20] sm:$0xff]
      %v103 = vld [vmem:[%s9 + $0x28] sm:$0xff]
      %v104 = vld [vmem:[%s10] sm:$0x1]
      %v106 = vlaneseq
      %v107 = vshrl.u32 %v106, 7
      %v108 = vsub.s32 0, %v107
      %v109 = vrot.slane %v104, %v108
      %vm111 = vcmask 392192
      %v113 = vsel %vm111, %v97, 0
      %115 = vmatprep.subr.mxu0 0.0
      %116 = vmatpush1.msra.mxu0 %v98
      %117 = vmatprep.subr.mxu0 0.0
      %118 = vmatpush1.msra.mxu0 %v99
      %119 = vmatprep.subr.mxu0 0.0
      %120 = vmatpush1.msra.mxu0 %v100
      %121 = vmatprep.subr.mxu0 0.0
      %122 = vmatpush1.msra.mxu0 %v101
      %123 = vmatprep.subr.mxu0 0.0
      %124 = vmatpush1.msra.mxu0 %v102
      %125 = vmatprep.subr.mxu0 0.0
      %126 = vmatpush1.msra.mxu0 %v103
      %127 = vmatprep.subr.mxu0 0.0
      %128 = vmatpush1.msra.mxu0 0.0
      %129 = vmatprep.subr.mxu0 0.0
      %130 = vmatpush1.msra.mxu0 0.0
      %131 = vmatprep.subr.mxu0 0.0
      %132 = vmatpush1.msra.mxu0 0.0
      %133 = vmatprep.subr.mxu0 0.0
      %134 = vmatpush1.msra.mxu0 0.0
      %135 = vmatprep.subr.mxu0 0.0
      %136 = vmatpush1.msra.mxu0 0.0
      %137 = vmatprep.subr.mxu0 0.0
      %138 = vmatpush1.msra.mxu0 0.0
      %139 = vmatprep.subr.mxu0 0.0
      %140 = vmatpush1.msra.mxu0 0.0
      %141 = vmatprep.subr.mxu0 0.0
      %142 = vmatpush1.msra.mxu0 0.0
      %143 = vmatprep.subr.mxu0 0.0
      %144 = vmatpush1.msra.mxu0 0.0
      %145 = vmatprep.subr.mxu0 0.0
      %146 = vmatpush1.msra.mxu0 0.0
      %147 = vmatprep.subr.mxu0 0.0
      %148 = vmatpush1.msra.mxu0 0.0
      %149 = vmatprep.subr.mxu0 0.0
      %150 = vmatpush1.msra.mxu0 0.0
      %151 = vmatprep.subr.mxu0 0.0
      %152 = vmatpush1.msra.mxu0 0.0
      %153 = vmatprep.subr.mxu0 0.0
      %154 = vmatpush1.msra.mxu0 0.0
      %155 = vmatprep.subr.mxu0 0.0
      %156 = vmatpush1.msra.mxu0 0.0
      %157 = vmatprep.subr.mxu0 0.0
      %158 = vmatpush1.msra.mxu0 0.0
      %159 = vmatprep.subr.mxu0 0.0
      %160 = vmatpush1.msra.mxu0 0.0
      %161 = vmatprep.subr.mxu0 0.0
      %162 = vmatpush1.msra.mxu0 0.0
      %163 = vmatprep.subr.mxu0 0.0
      %164 = vmatpush1.msra.mxu0 0.0
      %165 = vmatprep.subr.mxu0 0.0
      %166 = vmatpush1.msra.mxu0 0.0
      %167 = vmatprep.subr.mxu0 0.0
      %168 = vmatpush1.msra.mxu0 0.0
      %169 = vmatprep.subr.mxu0 0.0
      %170 = vmatpush1.msra.mxu0 0.0
      %171 = vmatprep.subr.mxu0 0.0
      %172 = vmatpush1.msra.mxu0 0.0
      %173 = vmatprep.subr.mxu0 0.0
      %174 = vmatpush1.msra.mxu0 0.0
      %175 = vmatprep.subr.mxu0 0.0
      %176 = vmatpush1.msra.mxu0 0.0
      %177 = vmatprep.subr.mxu0 0.0
      %178 = vmatpush1.msra.mxu0 0.0
      %179 = vmatprep.mubr.f32.mxu0 0.0
      %180 = vmatmul.mubr.f32.gmra.mrb[0].mxu0 %v113
      %v181 = vpop.f32.mrb[0].mxu0
      %v182 = vadd.f32 %v109, %v181
      %v183 = vpop.f32.mrb[0].mxu0
      %184 = vdwg.mxu0
      %v185 = vld [vmem:[%s2] sm:$0x3]
      %v186 = vld [vmem:[%s6] sm:$0xff]
      %v187 = vld [vmem:[%s6 + $0x8] sm:$0xff]
      %v188 = vld [vmem:[%s6 + $0x10] sm:$0xff]
      %vm189 = vcmask 195584
      %v191 = vsel %vm189, %v185, 0
      %193 = vmatprep.subr.mxu0 0.0
      %194 = vmatpush1.msra.mxu0 %v186
      %195 = vmatprep.subr.mxu0 0.0
      %196 = vmatpush1.msra.mxu0 %v187
      %197 = vmatprep.subr.mxu0 0.0
      %198 = vmatpush1.msra.mxu0 %v188
      %199 = vmatprep.subr.mxu0 0.0
      %200 = vmatpush1.msra.mxu0 0.0
      %201 = vmatprep.subr.mxu0 0.0
      %202 = vmatpush1.msra.mxu0 0.0
      %203 = vmatprep.subr.mxu0 0.0
      %204 = vmatpush1.msra.mxu0 0.0
      %205 = vmatprep.subr.mxu0 0.0
      %206 = vmatpush1.msra.mxu0 0.0
      %207 = vmatprep.subr.mxu0 0.0
      %208 = vmatpush1.msra.mxu0 0.0
      %209 = vmatprep.subr.mxu0 0.0
      %210 = vmatpush1.msra.mxu0 0.0
      %211 = vmatprep.subr.mxu0 0.0
      %212 = vmatpush1.msra.mxu0 0.0
      %213 = vmatprep.subr.mxu0 0.0
      %214 = vmatpush1.msra.mxu0 0.0
      %215 = vmatprep.subr.mxu0 0.0
      %216 = vmatpush1.msra.mxu0 0.0
      %217 = vmatprep.subr.mxu0 0.0
      %218 = vmatpush1.msra.mxu0 0.0
      %219 = vmatprep.subr.mxu0 0.0
      %220 = vmatpush1.msra.mxu0 0.0
      %221 = vmatprep.subr.mxu0 0.0
      %222 = vmatpush1.msra.mxu0 0.0
      %223 = vmatprep.subr.mxu0 0.0
      %224 = vmatpush1.msra.mxu0 0.0
      %225 = vmatprep.subr.mxu0 0.0
      %226 = vmatpush1.msra.mxu0 0.0
      %227 = vmatprep.subr.mxu0 0.0
      %228 = vmatpush1.msra.mxu0 0.0
      %229 = vmatprep.subr.mxu0 0.0
      %230 = vmatpush1.msra.mxu0 0.0
      %231 = vmatprep.subr.mxu0 0.0
      %232 = vmatpush1.msra.mxu0 0.0
      %233 = vmatprep.subr.mxu0 0.0
      %234 = vmatpush1.msra.mxu0 0.0
      %235 = vmatprep.subr.mxu0 0.0
      %236 = vmatpush1.msra.mxu0 0.0
      %237 = vmatprep.subr.mxu0 0.0
      %238 = vmatpush1.msra.mxu0 0.0
      %239 = vmatprep.subr.mxu0 0.0
      %240 = vmatpush1.msra.mxu0 0.0
      %241 = vmatprep.subr.mxu0 0.0
      %242 = vmatpush1.msra.mxu0 0.0
      %243 = vmatprep.subr.mxu0 0.0
      %244 = vmatpush1.msra.mxu0 0.0
      %245 = vmatprep.subr.mxu0 0.0
      %246 = vmatpush1.msra.mxu0 0.0
      %247 = vmatprep.subr.mxu0 0.0
      %248 = vmatpush1.msra.mxu0 0.0
      %249 = vmatprep.subr.mxu0 0.0
      %250 = vmatpush1.msra.mxu0 0.0
      %251 = vmatprep.subr.mxu0 0.0
      %252 = vmatpush1.msra.mxu0 0.0
      %253 = vmatprep.subr.mxu0 0.0
      %254 = vmatpush1.msra.mxu0 0.0
      %255 = vmatprep.subr.mxu0 0.0
      %256 = vmatpush1.msra.mxu0 0.0
      %257 = vmatprep.mubr.f32.mxu0 0.0
      %258 = vmatmul.mubr.f32.gmra.mrb[0].mxu0 %v191
      %v259 = vpop.f32.mrb[0].mxu0
      %v260 = vadd.f32 0.0, %v259
      %v261 = vpop.f32.mrb[0].mxu0
      %262 = vdwg.mxu0
      %v263 = vld [vmem:[%s8] sm:$0xff]
      %v264 = vld [vmem:[%s8 + $0x8] sm:$0xff]
      %v265 = vld [vmem:[%s8 + $0x10] sm:$0xff]
      %v266 = vld [vmem:[%s8 + $0x18] sm:$0xff]
      %v267 = vld [vmem:[%s8 + $0x20] sm:$0xff]
      %v268 = vld [vmem:[%s8 + $0x28] sm:$0xff]
      %v269 = vld [vmem:[%s8 + $0x30] sm:$0xff]
      %v270 = vld [vmem:[%s8 + $0x38] sm:$0xff]
      %v271 = vld [vmem:[%s8 + $0x40] sm:$0xff]
      %v272 = vld [vmem:[%s8 + $0x48] sm:$0xff]
      %v273 = vld [vmem:[%s8 + $0x50] sm:$0xff]
      %v274 = vld [vmem:[%s8 + $0x58] sm:$0xff]
      %vm275 = vcmask 785408
      %v277 = vsel %vm275, %v260, 0
      %279 = vmatprep.subr.mxu0 0.0
      %280 = vmatpush1.msra.mxu0 %v263
      %281 = vmatprep.subr.mxu0 0.0
      %282 = vmatpush1.msra.mxu0 %v264
      %283 = vmatprep.subr.mxu0 0.0
      %284 = vmatpush1.msra.mxu0 %v265
      %285 = vmatprep.subr.mxu0 0.0
      %286 = vmatpush1.msra.mxu0 %v266
      %287 = vmatprep.subr.mxu0 0.0
      %288 = vmatpush1.msra.mxu0 %v267
      %289 = vmatprep.subr.mxu0 0.0
      %290 = vmatpush1.msra.mxu0 %v268
      %291 = vmatprep.subr.mxu0 0.0
      %292 = vmatpush1.msra.mxu0 %v269
      %293 = vmatprep.subr.mxu0 0.0
      %294 = vmatpush1.msra.mxu0 %v270
      %295 = vmatprep.subr.mxu0 0.0
      %296 = vmatpush1.msra.mxu0 %v271
      %297 = vmatprep.subr.mxu0 0.0
      %298 = vmatpush1.msra.mxu0 %v272
      %299 = vmatprep.subr.mxu0 0.0
      %300 = vmatpush1.msra.mxu0 %v273
      %301 = vmatprep.subr.mxu0 0.0
      %302 = vmatpush1.msra.mxu0 %v274
      %303 = vmatprep.subr.mxu0 0.0
      %304 = vmatpush1.msra.mxu0 0.0
      %305 = vmatprep.subr.mxu0 0.0
      %306 = vmatpush1.msra.mxu0 0.0
      %307 = vmatprep.subr.mxu0 0.0
      %308 = vmatpush1.msra.mxu0 0.0
      %309 = vmatprep.subr.mxu0 0.0
      %310 = vmatpush1.msra.mxu0 0.0
      %311 = vmatprep.subr.mxu0 0.0
      %312 = vmatpush1.msra.mxu0 0.0
      %313 = vmatprep.subr.mxu0 0.0
      %314 = vmatpush1.msra.mxu0 0.0
      %315 = vmatprep.subr.mxu0 0.0
      %316 = vmatpush1.msra.mxu0 0.0
      %317 = vmatprep.subr.mxu0 0.0
      %318 = vmatpush1.msra.mxu0 0.0
      %319 = vmatprep.subr.mxu0 0.0
      %320 = vmatpush1.msra.mxu0 0.0
      %321 = vmatprep.subr.mxu0 0.0
      %322 = vmatpush1.msra.mxu0 0.0
      %323 = vmatprep.subr.mxu0 0.0
      %324 = vmatpush1.msra.mxu0 0.0
      %325 = vmatprep.subr.mxu0 0.0
      %326 = vmatpush1.msra.mxu0 0.0
      %327 = vmatprep.subr.mxu0 0.0
      %328 = vmatpush1.msra.mxu0 0.0
      %329 = vmatprep.subr.mxu0 0.0
      %330 = vmatpush1.msra.mxu0 0.0
      %331 = vmatprep.subr.mxu0 0.0
      %332 = vmatpush1.msra.mxu0 0.0
      %333 = vmatprep.subr.mxu0 0.0
      %334 = vmatpush1.msra.mxu0 0.0
      %335 = vmatprep.subr.mxu0 0.0
      %336 = vmatpush1.msra.mxu0 0.0
      %337 = vmatprep.subr.mxu0 0.0
      %338 = vmatpush1.msra.mxu0 0.0
      %339 = vmatprep.subr.mxu0 0.0
      %340 = vmatpush1.msra.mxu0 0.0
      %341 = vmatprep.subr.mxu0 0.0
      %342 = vmatpush1.msra.mxu0 0.0
      %343 = vmatprep.mubr.f32.mxu0 0.0
      %344 = vmatmul.mubr.f32.gmra.mrb[0].mxu0 %v277
      %v345 = vpop.f32.mrb[0].mxu0
      %v346 = vadd.f32 0.0, %v345
      %v347 = vpop.f32.mrb[0].mxu0
      %348 = vdwg.mxu0
      %v349 = vadd.f32 %v182, %v346
      %350 = vst [vmem:[#allocation2] sm:$0x3] %v349
    $region77: #{tpu_custom_call.1} parent=1 // pred_fallthru
      _
    %v351 = vld [vmem:[#allocation2] sm:$0x3]
    %v352 = vld [vmem:[#allocation4] sm:$0x3]
    %v353 = vld [vmem:[%s4] sm:$0xff]
    %v354 = vld [vmem:[#allocation6] sm:$0x3]
    %v355 = vld [vmem:[%s5] sm:$0xff]
    %v356 = vld [vmem:[%s5 + $0x8] sm:$0xff]
    %v357 = vld [vmem:[%s5 + $0x10] sm:$0xff]
    %vm358 = vcmask 195584
    %v360 = vsel %vm358, %v354, 0
    %362 = vmatprep.subr.mxu0 0.0
    %363 = vmatpush1.msra.mxu0 %v355
    %364 = vmatprep.subr.mxu0 0.0
    %365 = vmatpush1.msra.mxu0 %v356
    %366 = vmatprep.subr.mxu0 0.0
    %367 = vmatpush1.msra.mxu0 %v357
    %368 = vmatprep.subr.mxu0 0.0
    %369 = vmatpush1.msra.mxu0 0.0
    %370 = vmatprep.subr.mxu0 0.0
    %371 = vmatpush1.msra.mxu0 0.0
    %372 = vmatprep.subr.mxu0 0.0
    %373 = vmatpush1.msra.mxu0 0.0
    %374 = vmatprep.subr.mxu0 0.0
    %375 = vmatpush1.msra.mxu0 0.0
    %376 = vmatprep.subr.mxu0 0.0
    %377 = vmatpush1.msra.mxu0 0.0
    %378 = vmatprep.subr.mxu0 0.0
    %379 = vmatpush1.msra.mxu0 0.0
    %380 = vmatprep.subr.mxu0 0.0
    %381 = vmatpush1.msra.mxu0 0.0
    %382 = vmatprep.subr.mxu0 0.0
    %383 = vmatpush1.msra.mxu0 0.0
    %384 = vmatprep.subr.mxu0 0.0
    %385 = vmatpush1.msra.mxu0 0.0
    %386 = vmatprep.subr.mxu0 0.0
    %387 = vmatpush1.msra.mxu0 0.0
    %388 = vmatprep.subr.mxu0 0.0
    %389 = vmatpush1.msra.mxu0 0.0
    %390 = vmatprep.subr.mxu0 0.0
    %391 = vmatpush1.msra.mxu0 0.0
    %392 = vmatprep.subr.mxu0 0.0
    %393 = vmatpush1.msra.mxu0 0.0
    %394 = vmatprep.subr.mxu0 0.0
    %395 = vmatpush1.msra.mxu0 0.0
    %396 = vmatprep.subr.mxu0 0.0
    %397 = vmatpush1.msra.mxu0 0.0
    %398 = vmatprep.subr.mxu0 0.0
    %399 = vmatpush1.msra.mxu0 0.0
    %400 = vmatprep.subr.mxu0 0.0
    %401 = vmatpush1.msra.mxu0 0.0
    %402 = vmatprep.subr.mxu0 0.0
    %403 = vmatpush1.msra.mxu0 0.0
    %404 = vmatprep.subr.mxu0 0.0
    %405 = vmatpush1.msra.mxu0 0.0
    %406 = vmatprep.subr.mxu0 0.0
    %407 = vmatpush1.msra.mxu0 0.0
    %408 = vmatprep.subr.mxu0 0.0
    %409 = vmatpush1.msra.mxu0 0.0
    %410 = vmatprep.subr.mxu0 0.0
    %411 = vmatpush1.msra.mxu0 0.0
    %412 = vmatprep.subr.mxu0 0.0
    %413 = vmatpush1.msra.mxu0 0.0
    %414 = vmatprep.subr.mxu0 0.0
    %415 = vmatpush1.msra.mxu0 0.0
    %416 = vmatprep.subr.mxu0 0.0
    %417 = vmatpush1.msra.mxu0 0.0
    %418 = vmatprep.subr.mxu0 0.0
    %419 = vmatpush1.msra.mxu0 0.0
    %420 = vmatprep.subr.mxu0 0.0
    %421 = vmatpush1.msra.mxu0 0.0
    %422 = vmatprep.subr.mxu0 0.0
    %423 = vmatpush1.msra.mxu0 0.0
    %424 = vmatprep.subr.mxu0 0.0
    %425 = vmatpush1.msra.mxu0 0.0
    %426 = vmatprep.mubr.f32.mxu0 0.0
    %427 = vmatmul.mubr.f32.gmra.mrb[0].mxu0 %v360
    %v428 = vpop.f32.mrb[0].mxu0
    %v429 = vadd.f32 0.0, %v428
    %v430 = vpop.f32.mrb[0].mxu0
    %431 = vdwg.mxu0
    %vm432 = vcmask 64512
    %v434 = vsel %vm432, %v352, 0
    %436 = vmatprep.subr.mxu0 0.0
    %437 = vmatpush1.msra.mxu0 %v353
    %438 = vmatprep.subr.mxu0 0.0
    %439 = vmatpush1.msra.mxu0 0.0
    %440 = vmatprep.subr.mxu0 0.0
    %441 = vmatpush1.msra.mxu0 0.0
    %442 = vmatprep.subr.mxu0 0.0
    %443 = vmatpush1.msra.mxu0 0.0
    %444 = vmatprep.subr.mxu0 0.0
    %445 = vmatpush1.msra.mxu0 0.0
    %446 = vmatprep.subr.mxu0 0.0
    %447 = vmatpush1.msra.mxu0 0.0
    %448 = vmatprep.subr.mxu0 0.0
    %449 = vmatpush1.msra.mxu0 0.0
    %450 = vmatprep.subr.mxu0 0.0
    %451 = vmatpush1.msra.mxu0 0.0
    %452 = vmatprep.subr.mxu0 0.0
    %453 = vmatpush1.msra.mxu0 0.0
    %454 = vmatprep.subr.mxu0 0.0
    %455 = vmatpush1.msra.mxu0 0.0
    %456 = vmatprep.subr.mxu0 0.0
    %457 = vmatpush1.msra.mxu0 0.0
    %458 = vmatprep.subr.mxu0 0.0
    %459 = vmatpush1.msra.mxu0 0.0
    %460 = vmatprep.subr.mxu0 0.0
    %461 = vmatpush1.msra.mxu0 0.0
    %462 = vmatprep.subr.mxu0 0.0
    %463 = vmatpush1.msra.mxu0 0.0
    %464 = vmatprep.subr.mxu0 0.0
    %465 = vmatpush1.msra.mxu0 0.0
    %466 = vmatprep.subr.mxu0 0.0
    %467 = vmatpush1.msra.mxu0 0.0
    %468 = vmatprep.subr.mxu0 0.0
    %469 = vmatpush1.msra.mxu0 0.0
    %470 = vmatprep.subr.mxu0 0.0
    %471 = vmatpush1.msra.mxu0 0.0
    %472 = vmatprep.subr.mxu0 0.0
    %473 = vmatpush1.msra.mxu0 0.0
    %474 = vmatprep.subr.mxu0 0.0
    %475 = vmatpush1.msra.mxu0 0.0
    %476 = vmatprep.subr.mxu0 0.0
    %477 = vmatpush1.msra.mxu0 0.0
    %478 = vmatprep.subr.mxu0 0.0
    %479 = vmatpush1.msra.mxu0 0.0
    %480 = vmatprep.subr.mxu0 0.0
    %481 = vmatpush1.msra.mxu0 0.0
    %482 = vmatprep.subr.mxu0 0.0
    %483 = vmatpush1.msra.mxu0 0.0
    %484 = vmatprep.subr.mxu0 0.0
    %485 = vmatpush1.msra.mxu0 0.0
    %486 = vmatprep.subr.mxu0 0.0
    %487 = vmatpush1.msra.mxu0 0.0
    %488 = vmatprep.subr.mxu0 0.0
    %489 = vmatpush1.msra.mxu0 0.0
    %490 = vmatprep.subr.mxu0 0.0
    %491 = vmatpush1.msra.mxu0 0.0
    %492 = vmatprep.subr.mxu0 0.0
    %493 = vmatpush1.msra.mxu0 0.0
    %494 = vmatprep.subr.mxu0 0.0
    %495 = vmatpush1.msra.mxu0 0.0
    %496 = vmatprep.subr.mxu0 0.0
    %497 = vmatpush1.msra.mxu0 0.0
    %498 = vmatprep.subr.mxu0 0.0
    %499 = vmatpush1.msra.mxu0 0.0
    %500 = vmatprep.mubr.f32.mxu0 0.0
    %501 = vmatmul.mubr.f32.gmra.mrb[0].mxu0 %v434
    %v502 = vpop.f32.mrb[0].mxu0
    %v503 = vadd.f32 %v429, %v502
    %v504 = vpop.f32.mrb[0].mxu0
    %505 = vdwg.mxu0
    %v506 = vld [vmem:[#allocation8] sm:$0xff]
    %v507 = vld [vmem:[#allocation8 + $0x8] sm:$0xff]
    %v508 = vld [vmem:[#allocation8 + $0x10] sm:$0xff]
    %v509 = vld [vmem:[#allocation8 + $0x18] sm:$0xff]
    %v510 = vld [vmem:[#allocation8 + $0x20] sm:$0xff]
    %v511 = vld [vmem:[#allocation8 + $0x28] sm:$0xff]
    %v512 = vld [vmem:[#allocation8 + $0x30] sm:$0xff]
    %v513 = vld [vmem:[#allocation8 + $0x38] sm:$0xff]
    %v514 = vld [vmem:[#allocation8 + $0x40] sm:$0xff]
    %v515 = vld [vmem:[#allocation8 + $0x48] sm:$0xff]
    %v516 = vld [vmem:[#allocation8 + $0x50] sm:$0xff]
    %v517 = vld [vmem:[#allocation8 + $0x58] sm:$0xff]
    %v518 = vld [vmem:[#allocation8 + $0x60] sm:$0xff]
    %v519 = vld [vmem:[#allocation8 + $0x68] sm:$0xff]
    %v520 = vld [vmem:[#allocation8 + $0x70] sm:$0xff]
    %v521 = vld [vmem:[#allocation8 + $0x78] sm:$0xff]
    %522 = vmatprep.subr.mxu0 0.0
    %523 = vmatpush1.msra.mxu0 %v506
    %524 = vmatprep.subr.mxu0 0.0
    %525 = vmatpush1.msra.mxu0 %v507
    %526 = vmatprep.subr.mxu0 0.0
    %527 = vmatpush1.msra.mxu0 %v508
    %528 = vmatprep.subr.mxu0 0.0
    %529 = vmatpush1.msra.mxu0 %v509
    %530 = vmatprep.subr.mxu0 0.0
    %531 = vmatpush1.msra.mxu0 %v510
    %532 = vmatprep.subr.mxu0 0.0
    %533 = vmatpush1.msra.mxu0 %v511
    %534 = vmatprep.subr.mxu0 0.0
    %535 = vmatpush1.msra.mxu0 %v512
    %536 = vmatprep.subr.mxu0 0.0
    %537 = vmatpush1.msra.mxu0 %v513
    %538 = vmatprep.subr.mxu0 0.0
    %539 = vmatpush1.msra.mxu0 %v514
    %540 = vmatprep.subr.mxu0 0.0
    %541 = vmatpush1.msra.mxu0 %v515
    %542 = vmatprep.subr.mxu0 0.0
    %543 = vmatpush1.msra.mxu0 %v516
    %544 = vmatprep.subr.mxu0 0.0
    %545 = vmatpush1.msra.mxu0 %v517
    %546 = vmatprep.subr.mxu0 0.0
    %547 = vmatpush1.msra.mxu0 %v518
    %548 = vmatprep.subr.mxu0 0.0
    %549 = vmatpush1.msra.mxu0 %v519
    %550 = vmatprep.subr.mxu0 0.0
    %551 = vmatpush1.msra.mxu0 %v520
    %552 = vmatprep.subr.mxu0 0.0
    %553 = vmatpush1.msra.mxu0 %v521
    %554 = vmatprep.subr.mxu0 0.0
    %555 = vmatpush1.msra.mxu0 0.0
    %556 = vmatprep.subr.mxu0 0.0
    %557 = vmatpush1.msra.mxu0 0.0
    %558 = vmatprep.subr.mxu0 0.0
    %559 = vmatpush1.msra.mxu0 0.0
    %560 = vmatprep.subr.mxu0 0.0
    %561 = vmatpush1.msra.mxu0 0.0
    %562 = vmatprep.subr.mxu0 0.0
    %563 = vmatpush1.msra.mxu0 0.0
    %564 = vmatprep.subr.mxu0 0.0
    %565 = vmatpush1.msra.mxu0 0.0
    %566 = vmatprep.subr.mxu0 0.0
    %567 = vmatpush1.msra.mxu0 0.0
    %568 = vmatprep.subr.mxu0 0.0
    %569 = vmatpush1.msra.mxu0 0.0
    %570 = vmatprep.subr.mxu0 0.0
    %571 = vmatpush1.msra.mxu0 0.0
    %572 = vmatprep.subr.mxu0 0.0
    %573 = vmatpush1.msra.mxu0 0.0
    %574 = vmatprep.subr.mxu0 0.0
    %575 = vmatpush1.msra.mxu0 0.0
    %576 = vmatprep.subr.mxu0 0.0
    %577 = vmatpush1.msra.mxu0 0.0
    %578 = vmatprep.subr.mxu0 0.0
    %579 = vmatpush1.msra.mxu0 0.0
    %580 = vmatprep.subr.mxu0 0.0
    %581 = vmatpush1.msra.mxu0 0.0
    %582 = vmatprep.subr.mxu0 0.0
    %583 = vmatpush1.msra.mxu0 0.0
    %584 = vmatprep.subr.mxu0 0.0
    %585 = vmatpush1.msra.mxu0 0.0
    %586 = vmatprep.mubr.f32.mxu0 0.0
    %587 = vmatmul.mubr.f32.gmra.mrb[0].mxu0 %v503
    %v588 = vpop.f32.mrb[0].mxu0
    %v589 = vadd.f32 0.0, %v588
    %v590 = vpop.f32.mrb[0].mxu0
    %591 = vdwg.mxu0
    %v592 = vadd.f32 %v351, %v589
    %s593 = scalar_lea.vmem [#allocation4], 2
    %v594 = vld [vmem:[%s593] sm:$0x3]
    %s595 = scalar_lea.vmem [#allocation6], 2
    %v596 = vld [vmem:[%s595] sm:$0x3]
    %v598 = vsel %vm358, %v596, 0
    %600 = vmatprep.subr.mxu0 0.0
    %601 = vmatpush1.msra.mxu0 %v355
    %602 = vmatprep.subr.mxu0 0.0
    %603 = vmatpush1.msra.mxu0 %v356
    %604 = vmatprep.subr.mxu0 0.0
    %605 = vmatpush1.msra.mxu0 %v357
    %606 = vmatprep.subr.mxu0 0.0
    %607 = vmatpush1.msra.mxu0 0.0
    %608 = vmatprep.subr.mxu0 0.0
    %609 = vmatpush1.msra.mxu0 0.0
    %610 = vmatprep.subr.mxu0 0.0
    %611 = vmatpush1.msra.mxu0 0.0
    %612 = vmatprep.subr.mxu0 0.0
    %613 = vmatpush1.msra.mxu0 0.0
    %614 = vmatprep.subr.mxu0 0.0
    %615 = vmatpush1.msra.mxu0 0.0
    %616 = vmatprep.subr.mxu0 0.0
    %617 = vmatpush1.msra.mxu0 0.0
    %618 = vmatprep.subr.mxu0 0.0
    %619 = vmatpush1.msra.mxu0 0.0
    %620 = vmatprep.subr.mxu0 0.0
    %621 = vmatpush1.msra.mxu0 0.0
    %622 = vmatprep.subr.mxu0 0.0
    %623 = vmatpush1.msra.mxu0 0.0
    %624 = vmatprep.subr.mxu0 0.0
    %625 = vmatpush1.msra.mxu0 0.0
    %626 = vmatprep.subr.mxu0 0.0
    %627 = vmatpush1.msra.mxu0 0.0
    %628 = vmatprep.subr.mxu0 0.0
    %629 = vmatpush1.msra.mxu0 0.0
    %630 = vmatprep.subr.mxu0 0.0
    %631 = vmatpush1.msra.mxu0 0.0
    %632 = vmatprep.subr.mxu0 0.0
    %633 = vmatpush1.msra.mxu0 0.0
    %634 = vmatprep.subr.mxu0 0.0
    %635 = vmatpush1.msra.mxu0 0.0
    %636 = vmatprep.subr.mxu0 0.0
    %637 = vmatpush1.msra.mxu0 0.0
    %638 = vmatprep.subr.mxu0 0.0
    %639 = vmatpush1.msra.mxu0 0.0
    %640 = vmatprep.subr.mxu0 0.0
    %641 = vmatpush1.msra.mxu0 0.0
    %642 = vmatprep.subr.mxu0 0.0
    %643 = vmatpush1.msra.mxu0 0.0
    %644 = vmatprep.subr.mxu0 0.0
    %645 = vmatpush1.msra.mxu0 0.0
    %646 = vmatprep.subr.mxu0 0.0
    %647 = vmatpush1.msra.mxu0 0.0
    %648 = vmatprep.subr.mxu0 0.0
    %649 = vmatpush1.msra.mxu0 0.0
    %650 = vmatprep.subr.mxu0 0.0
    %651 = vmatpush1.msra.mxu0 0.0
    %652 = vmatprep.subr.mxu0 0.0
    %653 = vmatpush1.msra.mxu0 0.0
    %654 = vmatprep.subr.mxu0 0.0
    %655 = vmatpush1.msra.mxu0 0.0
    %656 = vmatprep.subr.mxu0 0.0
    %657 = vmatpush1.msra.mxu0 0.0
    %658 = vmatprep.subr.mxu0 0.0
    %659 = vmatpush1.msra.mxu0 0.0
    %660 = vmatprep.subr.mxu0 0.0
    %661 = vmatpush1.msra.mxu0 0.0
    %662 = vmatprep.subr.mxu0 0.0
    %663 = vmatpush1.msra.mxu0 0.0
    %664 = vmatprep.mubr.f32.mxu0 0.0
    %665 = vmatmul.mubr.f32.gmra.mrb[0].mxu0 %v598
    %v666 = vpop.f32.mrb[0].mxu0
    %v667 = vadd.f32 0.0, %v666
    %v668 = vpop.f32.mrb[0].mxu0
    %669 = vdwg.mxu0
    %v671 = vsel %vm432, %v594, 0
    %673 = vmatprep.subr.mxu0 0.0
    %674 = vmatpush1.msra.mxu0 %v353
    %675 = vmatprep.subr.mxu0 0.0
    %676 = vmatpush1.msra.mxu0 0.0
    %677 = vmatprep.subr.mxu0 0.0
    %678 = vmatpush1.msra.mxu0 0.0
    %679 = vmatprep.subr.mxu0 0.0
    %680 = vmatpush1.msra.mxu0 0.0
    %681 = vmatprep.subr.mxu0 0.0
    %682 = vmatpush1.msra.mxu0 0.0
    %683 = vmatprep.subr.mxu0 0.0
    %684 = vmatpush1.msra.mxu0 0.0
    %685 = vmatprep.subr.mxu0 0.0
    %686 = vmatpush1.msra.mxu0 0.0
    %687 = vmatprep.subr.mxu0 0.0
    %688 = vmatpush1.msra.mxu0 0.0
    %689 = vmatprep.subr.mxu0 0.0
    %690 = vmatpush1.msra.mxu0 0.0
    %691 = vmatprep.subr.mxu0 0.0
    %692 = vmatpush1.msra.mxu0 0.0
    %693 = vmatprep.subr.mxu0 0.0
    %694 = vmatpush1.msra.mxu0 0.0
    %695 = vmatprep.subr.mxu0 0.0
    %696 = vmatpush1.msra.mxu0 0.0
    %697 = vmatprep.subr.mxu0 0.0
    %698 = vmatpush1.msra.mxu0 0.0
    %699 = vmatprep.subr.mxu0 0.0
    %700 = vmatpush1.msra.mxu0 0.0
    %701 = vmatprep.subr.mxu0 0.0
    %702 = vmatpush1.msra.mxu0 0.0
    %703 = vmatprep.subr.mxu0 0.0
    %704 = vmatpush1.msra.mxu0 0.0
    %705 = vmatprep.subr.mxu0 0.0
    %706 = vmatpush1.msra.mxu0 0.0
    %707 = vmatprep.subr.mxu0 0.0
    %708 = vmatpush1.msra.mxu0 0.0
    %709 = vmatprep.subr.mxu0 0.0
    %710 = vmatpush1.msra.mxu0 0.0
    %711 = vmatprep.subr.mxu0 0.0
    %712 = vmatpush1.msra.mxu0 0.0
    %713 = vmatprep.subr.mxu0 0.0
    %714 = vmatpush1.msra.mxu0 0.0
    %715 = vmatprep.subr.mxu0 0.0
    %716 = vmatpush1.msra.mxu0 0.0
    %717 = vmatprep.subr.mxu0 0.0
    %718 = vmatpush1.msra.mxu0 0.0
    %719 = vmatprep.subr.mxu0 0.0
    %720 = vmatpush1.msra.mxu0 0.0
    %721 = vmatprep.subr.mxu0 0.0
    %722 = vmatpush1.msra.mxu0 0.0
    %723 = vmatprep.subr.mxu0 0.0
    %724 = vmatpush1.msra.mxu0 0.0
    %725 = vmatprep.subr.mxu0 0.0
    %726 = vmatpush1.msra.mxu0 0.0
    %727 = vmatprep.subr.mxu0 0.0
    %728 = vmatpush1.msra.mxu0 0.0
    %729 = vmatprep.subr.mxu0 0.0
    %730 = vmatpush1.msra.mxu0 0.0
    %731 = vmatprep.subr.mxu0 0.0
    %732 = vmatpush1.msra.mxu0 0.0
    %733 = vmatprep.subr.mxu0 0.0
    %734 = vmatpush1.msra.mxu0 0.0
    %735 = vmatprep.subr.mxu0 0.0
    %736 = vmatpush1.msra.mxu0 0.0
    %737 = vmatprep.mubr.f32.mxu0 0.0
    %738 = vmatmul.mubr.f32.gmra.mrb[0].mxu0 %v671
    %v739 = vpop.f32.mrb[0].mxu0
    %v740 = vadd.f32 %v667, %v739
    %v741 = vpop.f32.mrb[0].mxu0
    %742 = vdwg.mxu0
    %s743 = scalar_lea.vmem [#allocation8], 128
    %v744 = vld [vmem:[%s743] sm:$0xff]
    %v745 = vld [vmem:[%s743 + $0x8] sm:$0xff]
    %v746 = vld [vmem:[%s743 + $0x10] sm:$0xff]
    %v747 = vld [vmem:[%s743 + $0x18] sm:$0xff]
    %v748 = vld [vmem:[%s743 + $0x20] sm:$0xff]
    %v749 = vld [vmem:[%s743 + $0x28] sm:$0xff]
    %v750 = vld [vmem:[%s743 + $0x30] sm:$0xff]
    %v751 = vld [vmem:[%s743 + $0x38] sm:$0xff]
    %v752 = vld [vmem:[%s743 + $0x40] sm:$0xff]
    %v753 = vld [vmem:[%s743 + $0x48] sm:$0xff]
    %v754 = vld [vmem:[%s743 + $0x50] sm:$0xff]
    %v755 = vld [vmem:[%s743 + $0x58] sm:$0xff]
    %v756 = vld [vmem:[%s743 + $0x60] sm:$0xff]
    %v757 = vld [vmem:[%s743 + $0x68] sm:$0xff]
    %v758 = vld [vmem:[%s743 + $0x70] sm:$0xff]
    %v759 = vld [vmem:[%s743 + $0x78] sm:$0xff]
    %760 = vmatprep.subr.mxu0 0.0
    %761 = vmatpush1.msra.mxu0 %v744
    %762 = vmatprep.subr.mxu0 0.0
    %763 = vmatpush1.msra.mxu0 %v745
    %764 = vmatprep.subr.mxu0 0.0
    %765 = vmatpush1.msra.mxu0 %v746
    %766 = vmatprep.subr.mxu0 0.0
    %767 = vmatpush1.msra.mxu0 %v747
    %768 = vmatprep.subr.mxu0 0.0
    %769 = vmatpush1.msra.mxu0 %v748
    %770 = vmatprep.subr.mxu0 0.0
    %771 = vmatpush1.msra.mxu0 %v749
    %772 = vmatprep.subr.mxu0 0.0
    %773 = vmatpush1.msra.mxu0 %v750
    %774 = vmatprep.subr.mxu0 0.0
    %775 = vmatpush1.msra.mxu0 %v751
    %776 = vmatprep.subr.mxu0 0.0
    %777 = vmatpush1.msra.mxu0 %v752
    %778 = vmatprep.subr.mxu0 0.0
    %779 = vmatpush1.msra.mxu0 %v753
    %780 = vmatprep.subr.mxu0 0.0
    %781 = vmatpush1.msra.mxu0 %v754
    %782 = vmatprep.subr.mxu0 0.0
    %783 = vmatpush1.msra.mxu0 %v755
    %784 = vmatprep.subr.mxu0 0.0
    %785 = vmatpush1.msra.mxu0 %v756
    %786 = vmatprep.subr.mxu0 0.0
    %787 = vmatpush1.msra.mxu0 %v757
    %788 = vmatprep.subr.mxu0 0.0
    %789 = vmatpush1.msra.mxu0 %v758
    %790 = vmatprep.subr.mxu0 0.0
    %791 = vmatpush1.msra.mxu0 %v759
    %792 = vmatprep.subr.mxu0 0.0
    %793 = vmatpush1.msra.mxu0 0.0
    %794 = vmatprep.subr.mxu0 0.0
    %795 = vmatpush1.msra.mxu0 0.0
    %796 = vmatprep.subr.mxu0 0.0
    %797 = vmatpush1.msra.mxu0 0.0
    %798 = vmatprep.subr.mxu0 0.0
    %799 = vmatpush1.msra.mxu0 0.0
    %800 = vmatprep.subr.mxu0 0.0
    %801 = vmatpush1.msra.mxu0 0.0
    %802 = vmatprep.subr.mxu0 0.0
    %803 = vmatpush1.msra.mxu0 0.0
    %804 = vmatprep.subr.mxu0 0.0
    %805 = vmatpush1.msra.mxu0 0.0
    %806 = vmatprep.subr.mxu0 0.0
    %807 = vmatpush1.msra.mxu0 0.0
    %808 = vmatprep.subr.mxu0 0.0
    %809 = vmatpush1.msra.mxu0 0.0
    %810 = vmatprep.subr.mxu0 0.0
    %811 = vmatpush1.msra.mxu0 0.0
    %812 = vmatprep.subr.mxu0 0.0
    %813 = vmatpush1.msra.mxu0 0.0
    %814 = vmatprep.subr.mxu0 0.0
    %815 = vmatpush1.msra.mxu0 0.0
    %816 = vmatprep.subr.mxu0 0.0
    %817 = vmatpush1.msra.mxu0 0.0
    %818 = vmatprep.subr.mxu0 0.0
    %819 = vmatpush1.msra.mxu0 0.0
    %820 = vmatprep.subr.mxu0 0.0
    %821 = vmatpush1.msra.mxu0 0.0
    %822 = vmatprep.subr.mxu0 0.0
    %823 = vmatpush1.msra.mxu0 0.0
    %824 = vmatprep.mubr.f32.mxu0 0.0
    %825 = vmatmul.mubr.f32.gmra.mrb[0].mxu0 %v740
    %v826 = vpop.f32.mrb[0].mxu0
    %v827 = vadd.f32 0.0, %v826
    %v828 = vpop.f32.mrb[0].mxu0
    %829 = vdwg.mxu0
    %v830 = vadd.f32 %v592, %v827
    %s831 = scalar_lea.vmem [#allocation4], 4
    %v832 = vld [vmem:[%s831] sm:$0x3]
    %s833 = scalar_lea.vmem [#allocation6], 4
    %v834 = vld [vmem:[%s833] sm:$0x3]
    %v836 = vsel %vm358, %v834, 0
    %838 = vmatprep.subr.mxu0 0.0
    %839 = vmatpush1.msra.mxu0 %v355
    %840 = vmatprep.subr.mxu0 0.0
    %841 = vmatpush1.msra.mxu0 %v356
    %842 = vmatprep.subr.mxu0 0.0
    %843 = vmatpush1.msra.mxu0 %v357
    %844 = vmatprep.subr.mxu0 0.0
    %845 = vmatpush1.msra.mxu0 0.0
    %846 = vmatprep.subr.mxu0 0.0
    %847 = vmatpush1.msra.mxu0 0.0
    %848 = vmatprep.subr.mxu0 0.0
    %849 = vmatpush1.msra.mxu0 0.0
    %850 = vmatprep.subr.mxu0 0.0
    %851 = vmatpush1.msra.mxu0 0.0
    %852 = vmatprep.subr.mxu0 0.0
    %853 = vmatpush1.msra.mxu0 0.0
    %854 = vmatprep.subr.mxu0 0.0
    %855 = vmatpush1.msra.mxu0 0.0
    %856 = vmatprep.subr.mxu0 0.0
    %857 = vmatpush1.msra.mxu0 0.0
    %858 = vmatprep.subr.mxu0 0.0
    %859 = vmatpush1.msra.mxu0 0.0
    %860 = vmatprep.subr.mxu0 0.0
    %861 = vmatpush1.msra.mxu0 0.0
    %862 = vmatprep.subr.mxu0 0.0
    %863 = vmatpush1.msra.mxu0 0.0
    %864 = vmatprep.subr.mxu0 0.0
    %865 = vmatpush1.msra.mxu0 0.0
    %866 = vmatprep.subr.mxu0 0.0
    %867 = vmatpush1.msra.mxu0 0.0
    %868 = vmatprep.subr.mxu0 0.0
    %869 = vmatpush1.msra.mxu0 0.0
    %870 = vmatprep.subr.mxu0 0.0
    %871 = vmatpush1.msra.mxu0 0.0
    %872 = vmatprep.subr.mxu0 0.0
    %873 = vmatpush1.msra.mxu0 0.0
    %874 = vmatprep.subr.mxu0 0.0
    %875 = vmatpush1.msra.mxu0 0.0
    %876 = vmatprep.subr.mxu0 0.0
    %877 = vmatpush1.msra.mxu0 0.0
    %878 = vmatprep.subr.mxu0 0.0
    %879 = vmatpush1.msra.mxu0 0.0
    %880 = vmatprep.subr.mxu0 0.0
    %881 = vmatpush1.msra.mxu0 0.0
    %882 = vmatprep.subr.mxu0 0.0
    %883 = vmatpush1.msra.mxu0 0.0
    %884 = vmatprep.subr.mxu0 0.0
    %885 = vmatpush1.msra.mxu0 0.0
    %886 = vmatprep.subr.mxu0 0.0
    %887 = vmatpush1.msra.mxu0 0.0
    %888 = vmatprep.subr.mxu0 0.0
    %889 = vmatpush1.msra.mxu0 0.0
    %890 = vmatprep.subr.mxu0 0.0
    %891 = vmatpush1.msra.mxu0 0.0
    %892 = vmatprep.subr.mxu0 0.0
    %893 = vmatpush1.msra.mxu0 0.0
    %894 = vmatprep.subr.mxu0 0.0
    %895 = vmatpush1.msra.mxu0 0.0
    %896 = vmatprep.subr.mxu0 0.0
    %897 = vmatpush1.msra.mxu0 0.0
    %898 = vmatprep.subr.mxu0 0.0
    %899 = vmatpush1.msra.mxu0 0.0
    %900 = vmatprep.subr.mxu0 0.0
    %901 = vmatpush1.msra.mxu0 0.0
    %902 = vmatprep.mubr.f32.mxu0 0.0
    %903 = vmatmul.mubr.f32.gmra.mrb[0].mxu0 %v836
    %v904 = vpop.f32.mrb[0].mxu0
    %v905 = vadd.f32 0.0, %v904
    %v906 = vpop.f32.mrb[0].mxu0
    %907 = vdwg.mxu0
    %v909 = vsel %vm432, %v832, 0
    %911 = vmatprep.subr.mxu0 0.0
    %912 = vmatpush1.msra.mxu0 %v353
    %913 = vmatprep.subr.mxu0 0.0
    %914 = vmatpush1.msra.mxu0 0.0
    %915 = vmatprep.subr.mxu0 0.0
    %916 = vmatpush1.msra.mxu0 0.0
    %917 = vmatprep.subr.mxu0 0.0
    %918 = vmatpush1.msra.mxu0 0.0
    %919 = vmatprep.subr.mxu0 0.0
    %920 = vmatpush1.msra.mxu0 0.0
    %921 = vmatprep.subr.mxu0 0.0
    %922 = vmatpush1.msra.mxu0 0.0
    %923 = vmatprep.subr.mxu0 0.0
    %924 = vmatpush1.msra.mxu0 0.0
    %925 = vmatprep.subr.mxu0 0.0
    %926 = vmatpush1.msra.mxu0 0.0
    %927 = vmatprep.subr.mxu0 0.0
    %928 = vmatpush1.msra.mxu0 0.0
    %929 = vmatprep.subr.mxu0 0.0
    %930 = vmatpush1.msra.mxu0 0.0
    %931 = vmatprep.subr.mxu0 0.0
    %932 = vmatpush1.msra.mxu0 0.0
    %933 = vmatprep.subr.mxu0 0.0
    %934 = vmatpush1.msra.mxu0 0.0
    %935 = vmatprep.subr.mxu0 0.0
    %936 = vmatpush1.msra.mxu0 0.0
    %937 = vmatprep.subr.mxu0 0.0
    %938 = vmatpush1.msra.mxu0 0.0
    %939 = vmatprep.subr.mxu0 0.0
    %940 = vmatpush1.msra.mxu0 0.0
    %941 = vmatprep.subr.mxu0 0.0
    %942 = vmatpush1.msra.mxu0 0.0
    %943 = vmatprep.subr.mxu0 0.0
    %944 = vmatpush1.msra.mxu0 0.0
    %945 = vmatprep.subr.mxu0 0.0
    %946 = vmatpush1.msra.mxu0 0.0
    %947 = vmatprep.subr.mxu0 0.0
    %948 = vmatpush1.msra.mxu0 0.0
    %949 = vmatprep.subr.mxu0 0.0
    %950 = vmatpush1.msra.mxu0 0.0
    %951 = vmatprep.subr.mxu0 0.0
    %952 = vmatpush1.msra.mxu0 0.0
    %953 = vmatprep.subr.mxu0 0.0
    %954 = vmatpush1.msra.mxu0 0.0
    %955 = vmatprep.subr.mxu0 0.0
    %956 = vmatpush1.msra.mxu0 0.0
    %957 = vmatprep.subr.mxu0 0.0
    %958 = vmatpush1.msra.mxu0 0.0
    %959 = vmatprep.subr.mxu0 0.0
    %960 = vmatpush1.msra.mxu0 0.0
    %961 = vmatprep.subr.mxu0 0.0
    %962 = vmatpush1.msra.mxu0 0.0
    %963 = vmatprep.subr.mxu0 0.0
    %964 = vmatpush1.msra.mxu0 0.0
    %965 = vmatprep.subr.mxu0 0.0
    %966 = vmatpush1.msra.mxu0 0.0
    %967 = vmatprep.subr.mxu0 0.0
    %968 = vmatpush1.msra.mxu0 0.0
    %969 = vmatprep.subr.mxu0 0.0
    %970 = vmatpush1.msra.mxu0 0.0
    %971 = vmatprep.subr.mxu0 0.0
    %972 = vmatpush1.msra.mxu0 0.0
    %973 = vmatprep.subr.mxu0 0.0
    %974 = vmatpush1.msra.mxu0 0.0
    %975 = vmatprep.mubr.f32.mxu0 0.0
    %976 = vmatmul.mubr.f32.gmra.mrb[0].mxu0 %v909
    %v977 = vpop.f32.mrb[0].mxu0
    %v978 = vadd.f32 %v905, %v977
    %v979 = vpop.f32.mrb[0].mxu0
    %980 = vdwg.mxu0
    %s981 = scalar_lea.vmem [#allocation8], 256
    %v982 = vld [vmem:[%s981] sm:$0xff]
    %v983 = vld [vmem:[%s981 + $0x8] sm:$0xff]
    %v984 = vld [vmem:[%s981 + $0x10] sm:$0xff]
    %v985 = vld [vmem:[%s981 + $0x18] sm:$0xff]
    %v986 = vld [vmem:[%s981 + $0x20] sm:$0xff]
    %v987 = vld [vmem:[%s981 + $0x28] sm:$0xff]
    %v988 = vld [vmem:[%s981 + $0x30] sm:$0xff]
    %v989 = vld [vmem:[%s981 + $0x38] sm:$0xff]
    %v990 = vld [vmem:[%s981 + $0x40] sm:$0xff]
    %v991 = vld [vmem:[%s981 + $0x48] sm:$0xff]
    %v992 = vld [vmem:[%s981 + $0x50] sm:$0xff]
    %v993 = vld [vmem:[%s981 + $0x58] sm:$0xff]
    %v994 = vld [vmem:[%s981 + $0x60] sm:$0xff]
    %v995 = vld [vmem:[%s981 + $0x68] sm:$0xff]
    %v996 = vld [vmem:[%s981 + $0x70] sm:$0xff]
    %v997 = vld [vmem:[%s981 + $0x78] sm:$0xff]
    %998 = vmatprep.subr.mxu0 0.0
    %999 = vmatpush1.msra.mxu0 %v982
    %1000 = vmatprep.subr.mxu0 0.0
    %1001 = vmatpush1.msra.mxu0 %v983
    %1002 = vmatprep.subr.mxu0 0.0
    %1003 = vmatpush1.msra.mxu0 %v984
    %1004 = vmatprep.subr.mxu0 0.0
    %1005 = vmatpush1.msra.mxu0 %v985
    %1006 = vmatprep.subr.mxu0 0.0
    %1007 = vmatpush1.msra.mxu0 %v986
    %1008 = vmatprep.subr.mxu0 0.0
    %1009 = vmatpush1.msra.mxu0 %v987
    %1010 = vmatprep.subr.mxu0 0.0
    %1011 = vmatpush1.msra.mxu0 %v988
    %1012 = vmatprep.subr.mxu0 0.0
    %1013 = vmatpush1.msra.mxu0 %v989
    %1014 = vmatprep.subr.mxu0 0.0
    %1015 = vmatpush1.msra.mxu0 %v990
    %1016 = vmatprep.subr.mxu0 0.0
    %1017 = vmatpush1.msra.mxu0 %v991
    %1018 = vmatprep.subr.mxu0 0.0
    %1019 = vmatpush1.msra.mxu0 %v992
    %1020 = vmatprep.subr.mxu0 0.0
    %1021 = vmatpush1.msra.mxu0 %v993
    %1022 = vmatprep.subr.mxu0 0.0
    %1023 = vmatpush1.msra.mxu0 %v994
    %1024 = vmatprep.subr.mxu0 0.0
    %1025 = vmatpush1.msra.mxu0 %v995
    %1026 = vmatprep.subr.mxu0 0.0
    %1027 = vmatpush1.msra.mxu0 %v996
    %1028 = vmatprep.subr.mxu0 0.0
    %1029 = vmatpush1.msra.mxu0 %v997
    %1030 = vmatprep.subr.mxu0 0.0
    %1031 = vmatpush1.msra.mxu0 0.0
    %1032 = vmatprep.subr.mxu0 0.0
    %1033 = vmatpush1.msra.mxu0 0.0
    %1034 = vmatprep.subr.mxu0 0.0
    %1035 = vmatpush1.msra.mxu0 0.0
    %1036 = vmatprep.subr.mxu0 0.0
    %1037 = vmatpush1.msra.mxu0 0.0
    %1038 = vmatprep.subr.mxu0 0.0
    %1039 = vmatpush1.msra.mxu0 0.0
    %1040 = vmatprep.subr.mxu0 0.0
    %1041 = vmatpush1.msra.mxu0 0.0
    %1042 = vmatprep.subr.mxu0 0.0
    %1043 = vmatpush1.msra.mxu0 0.0
    %1044 = vmatprep.subr.mxu0 0.0
    %1045 = vmatpush1.msra.mxu0 0.0
    %1046 = vmatprep.subr.mxu0 0.0
    %1047 = vmatpush1.msra.mxu0 0.0
    %1048 = vmatprep.subr.mxu0 0.0
    %1049 = vmatpush1.msra.mxu0 0.0
    %1050 = vmatprep.subr.mxu0 0.0
    %1051 = vmatpush1.msra.mxu0 0.0
    %1052 = vmatprep.subr.mxu0 0.0
    %1053 = vmatpush1.msra.mxu0 0.0
    %1054 = vmatprep.subr.mxu0 0.0
    %1055 = vmatpush1.msra.mxu0 0.0
    %1056 = vmatprep.subr.mxu0 0.0
    %1057 = vmatpush1.msra.mxu0 0.0
    %1058 = vmatprep.subr.mxu0 0.0
    %1059 = vmatpush1.msra.mxu0 0.0
    %1060 = vmatprep.subr.mxu0 0.0
    %1061 = vmatpush1.msra.mxu0 0.0
    %1062 = vmatprep.mubr.f32.mxu0 0.0
    %1063 = vmatmul.mubr.f32.gmra.mrb[0].mxu0 %v978
    %v1064 = vpop.f32.mrb[0].mxu0
    %v1065 = vadd.f32 0.0, %v1064
    %v1066 = vpop.f32.mrb[0].mxu0
    %1067 = vdwg.mxu0
    %v1068 = vadd.f32 %v830, %v1065
    %1069 = vst [vmem:[#allocation2] sm:$0x3] %v1068
    // Predicated region
    $region78: #{tpu_custom_call.1} parent=1 // pred_check
      %p1070 = pneg %p93
    $region79: #{tpu_custom_call.1} parent=1 // pred_check_branch
      %1072 = sbr.rel (%p1070) target = $region81
    $region80: #{tpu_custom_call.1} parent=1 // pred_region
      %v1073 = vld [vmem:[#allocation2] sm:$0x3]
      %v1074 = vld [vmem:[%s11] sm:$0xff]
      %v1075 = vld [vmem:[%s11 + $0x8] sm:$0xff]
      %v1076 = vld [vmem:[%s11 + $0x10] sm:$0xff]
      %v1077 = vld [vmem:[%s11 + $0x18] sm:$0xff]
      %v1078 = vld [vmem:[%s11 + $0x20] sm:$0xff]
      %v1079 = vld [vmem:[%s11 + $0x28] sm:$0xff]
      %v1080 = vld [vmem:[%s11 + $0x30] sm:$0xff]
      %v1081 = vld [vmem:[%s11 + $0x38] sm:$0xff]
      %v1082 = vld [vmem:[%s11 + $0x40] sm:$0xff]
      %v1083 = vld [vmem:[%s11 + $0x48] sm:$0xff]
      %v1084 = vld [vmem:[%s11 + $0x50] sm:$0xff]
      %v1085 = vld [vmem:[%s11 + $0x58] sm:$0xff]
      %v1086 = vld [vmem:[%s11 + $0x60] sm:$0xff]
      %v1087 = vld [vmem:[%s11 + $0x68] sm:$0xff]
      %v1088 = vld [vmem:[%s11 + $0x70] sm:$0xff]
      %v1089 = vld [vmem:[%s11 + $0x78] sm:$0xff]
      %v1090 = vld [vmem:[%s12] sm:$0x1]
      %v1092 = vlaneseq
      %v1093 = vshrl.u32 %v1092, 7
      %v1094 = vsub.s32 0, %v1093
      %v1095 = vrot.slane %v1090, %v1094
      %1097 = vmatprep.subr.mxu0 0.0
      %1098 = vmatpush1.msra.mxu0 %v1074
      %1099 = vmatprep.subr.mxu0 0.0
      %1100 = vmatpush1.msra.mxu0 %v1075
      %1101 = vmatprep.subr.mxu0 0.0
      %1102 = vmatpush1.msra.mxu0 %v1076
      %1103 = vmatprep.subr.mxu0 0.0
      %1104 = vmatpush1.msra.mxu0 %v1077
      %1105 = vmatprep.subr.mxu0 0.0
      %1106 = vmatpush1.msra.mxu0 %v1078
      %1107 = vmatprep.subr.mxu0 0.0
      %1108 = vmatpush1.msra.mxu0 %v1079
      %1109 = vmatprep.subr.mxu0 0.0
      %1110 = vmatpush1.msra.mxu0 %v1080
      %1111 = vmatprep.subr.mxu0 0.0
      %1112 = vmatpush1.msra.mxu0 %v1081
      %1113 = vmatprep.subr.mxu0 0.0
      %1114 = vmatpush1.msra.mxu0 %v1082
      %1115 = vmatprep.subr.mxu0 0.0
      %1116 = vmatpush1.msra.mxu0 %v1083
      %1117 = vmatprep.subr.mxu0 0.0
      %1118 = vmatpush1.msra.mxu0 %v1084
      %1119 = vmatprep.subr.mxu0 0.0
      %1120 = vmatpush1.msra.mxu0 %v1085
      %1121 = vmatprep.subr.mxu0 0.0
      %1122 = vmatpush1.msra.mxu0 %v1086
      %1123 = vmatprep.subr.mxu0 0.0
      %1124 = vmatpush1.msra.mxu0 %v1087
      %1125 = vmatprep.subr.mxu0 0.0
      %1126 = vmatpush1.msra.mxu0 %v1088
      %1127 = vmatprep.subr.mxu0 0.0
      %1128 = vmatpush1.msra.mxu0 %v1089
      %1129 = vmatprep.subr.mxu0 0.0
      %1130 = vmatpush1.msra.mxu0 0.0
      %1131 = vmatprep.subr.mxu0 0.0
      %1132 = vmatpush1.msra.mxu0 0.0
      %1133 = vmatprep.subr.mxu0 0.0
      %1134 = vmatpush1.msra.mxu0 0.0
      %1135 = vmatprep.subr.mxu0 0.0
      %1136 = vmatpush1.msra.mxu0 0.0
      %1137 = vmatprep.subr.mxu0 0.0
      %1138 = vmatpush1.msra.mxu0 0.0
      %1139 = vmatprep.subr.mxu0 0.0
      %1140 = vmatpush1.msra.mxu0 0.0
      %1141 = vmatprep.subr.mxu0 0.0
      %1142 = vmatpush1.msra.mxu0 0.0
      %1143 = vmatprep.subr.mxu0 0.0
      %1144 = vmatpush1.msra.mxu0 0.0
      %1145 = vmatprep.subr.mxu0 0.0
      %1146 = vmatpush1.msra.mxu0 0.0
      %1147 = vmatprep.subr.mxu0 0.0
      %1148 = vmatpush1.msra.mxu0 0.0
      %1149 = vmatprep.subr.mxu0 0.0
      %1150 = vmatpush1.msra.mxu0 0.0
      %1151 = vmatprep.subr.mxu0 0.0
      %1152 = vmatpush1.msra.mxu0 0.0
      %1153 = vmatprep.subr.mxu0 0.0
      %1154 = vmatpush1.msra.mxu0 0.0
      %1155 = vmatprep.subr.mxu0 0.0
      %1156 = vmatpush1.msra.mxu0 0.0
      %1157 = vmatprep.subr.mxu0 0.0
      %1158 = vmatpush1.msra.mxu0 0.0
      %1159 = vmatprep.subr.mxu0 0.0
      %1160 = vmatpush1.msra.mxu0 0.0
      %1161 = vmatprep.mubr.f32.mxu0 0.0
      %1162 = vmatmul.mubr.f32.gmra.mrb[0].mxu0 %v1073
      %v1163 = vpop.f32.mrb[0].mxu0
      %v1164 = vadd.f32 %v1095, %v1163
      %v1165 = vpop.f32.mrb[0].mxu0
      %1166 = vdwg.mxu0
      %v1167 = vmax.f32 %v1164, 0.0
      %v1168 = vld [vmem:[%s13] sm:$0x1]
      %v1170 = vlaneseq
      %v1171 = vshrl.u32 %v1170, 7
      %v1172 = vsub.s32 0, %v1171
      %v1173 = vrot.slane %v1168, %v1172
      %v1175 = vmul.f32 %v1167, %v1173
      %vm1176 = vcmask 517120
      %v1177 = vsel %vm1176, %v1175, 0.0
      %1178 = vadd.xlane.f32.xlu0 %v1177
      %v1179 = vpop.xlane.xlu0 %1178
      %v1180 = vld [vmem:[#allocation3] sm:$0x1]
      %v1182 = vlaneseq
      %v1183 = vshrl.u32 %v1182, 7
      %v1184 = vsub.s32 0, %v1183
      %v1185 = vrot.slane %v1180, %v1184
      %v1187 = vadd.f32 %v1179, %v1185
      %vm1188 = vcmask 1024
      %1189 = vst.msk [vmem:[%s15] sm:$0x3] %vm1188, %v1187
    $region81: #{tpu_custom_call.1} parent=1 // pred_fallthru
      _
    // Predicated region
    $region82: #{tpu_custom_call.1} parent=1 // pred_check
      _
    $region83: #{tpu_custom_call.1} parent=1 // pred_check_branch
      %1191 = sbr.rel (0) target = $region85
    $region84: #{tpu_custom_call.1} parent=1 // pred_region
      _
    $region85: #{tpu_custom_call.1} parent=1 // pred_fallthru
      _
    // Predicated region
    $region86: #{tpu_custom_call.1} parent=1 // pred_check
      _
    $region87: #{tpu_custom_call.1} parent=1 // pred_check_branch
      %1193 = sbr.rel (0) target = $region89
    $region88: #{tpu_custom_call.1} parent=1 // pred_region
      _
    $region89: #{tpu_custom_call.1} parent=1 // pred_fallthru
      _
    %1194 = vsyncpa [#allocation5], 1
    %1195 = vsyncpa [#allocation7], 1

</llo_original>
